<compile_context>
chip_gen: v7x
topology: tpu7x:2x2x1
jax: 0.10.0
libtpu: 0.0.40
codegen_flags: <defaults>
</compile_context>

<pallas_src>
import functools

import jax
import jax.numpy as jnp
from jax import lax
from jax.experimental import pallas as pl
from jax.experimental.pallas import tpu as pltpu


def nodlink_kernel(x_ref, eps_ref, b_ref,
                   w1_ref, w2_ref, w34_ref, dw1_ref, dw2_ref, dw3_ref,
                   out_ref, kl_ref, *, h4):
    # Static padded dims derived from the (static) ref shapes; all are
    # multiples of 128, so every slice below is lane-aligned (whole vregs).
    hp = w1_ref.shape[1]          # padded h
    hp2 = w2_ref.shape[1]         # padded h // 2
    hp4 = w34_ref.shape[1] // 2   # padded h // 4
    out_pad = dw3_ref.shape[1]

    # Offsets into the bias slab [b1 | b2 | b3 | b4 | db1 | db2 | db3].
    o2 = hp
    o3 = o2 + hp2
    od1 = o3 + 2 * hp4
    od2 = od1 + hp2
    od3 = od2 + hp

    b1 = b_ref[:, :o2]
    b2 = b_ref[:, o2:o3]
    b34 = b_ref[:, o3:od1]
    db1 = b_ref[:, od1:od2]
    db2 = b_ref[:, od2:od3]
    db3 = b_ref[:, od3:od3 + out_pad]

    x = x_ref[...]
    eps = eps_ref[...]

    # ----- encoder -----
    a = jnp.maximum(jnp.dot(x, w1_ref[...], preferred_element_type=jnp.float32) + b1, 0.0)
    a = jnp.maximum(jnp.dot(a, w2_ref[...], preferred_element_type=jnp.float32) + b2, 0.0)
    # Fused mu | log-sigma heads: one MXU push; both slices are vreg-aligned.
    ms = jnp.dot(a, w34_ref[...], preferred_element_type=jnp.float32) + b34
    mu = ms[:, :hp4]
    s = ms[:, hp4:]               # pre-exp logit; log(sigma) == s exactly
    sigma = jnp.exp(s)

    # Reparameterization. Padded lanes of z are harmless: the padded rows of
    # dw1 are zero, so they never reach the decoder output.
    z = mu + sigma * eps

    # KL of the PyTorch module: sum(sigma^2 + mu^2 - log(sigma) - 0.5), using
    # s in place of log(sigma). Mask out the padded lanes (each would add 0.5).
    lane = lax.broadcasted_iota(jnp.int32, mu.shape, 1)
    kl_terms = jnp.where(lane < h4, sigma * sigma + mu * mu - s - 0.5, 0.0)
    kl_val = jnp.sum(kl_terms)

    # Store the scalar KL into a lane-dense (8,128) slab (value at [0,0]).
    r = lax.broadcasted_iota(jnp.int32, kl_ref.shape, 0)
    c = lax.broadcasted_iota(jnp.int32, kl_ref.shape, 1)
    kl_ref[...] = jnp.where((r == 0) & (c == 0), kl_val, 0.0)

    # ----- decoder -----
    d = jnp.maximum(jnp.dot(z, dw1_ref[...], preferred_element_type=jnp.float32) + db1, 0.0)
    d = jnp.maximum(jnp.dot(d, dw2_ref[...], preferred_element_type=jnp.float32) + db2, 0.0)
    out_ref[...] = jnp.dot(d, dw3_ref[...], preferred_element_type=jnp.float32) + db3


def prepare_params(params):
    """One-time (init-time) fusion / lane-padding of raw parameters.

    params: flat list [w1,b1,w2,b2,w3,b3,w4,b4,dw1,db1,dw2,db2,dw3,db3] with
    weights [in_features, out_features] and biases [1, out_features].

    Returns (prepared, h4) where prepared =
      (w1p, w2p, w34p, dw1p, dw2p, dw3p, b_all) with every output width padded
      to a multiple of 128 lanes (zeros), and b_all a single lane-aligned bias
      slab [b1|b2|b3|b4|db1|db2|db3].
    """
    (w1, b1, w2, b2, w3, b3, w4, b4,
     dw1, db1, dw2, db2, dw3, db3) = params

    lane = 128
    rnd = lambda n: ((n + lane - 1) // lane) * lane
    pad_cols = lambda a, to: jnp.pad(a, ((0, 0), (0, to - a.shape[1])))
    pad_rows = lambda a, to: jnp.pad(a, ((0, to - a.shape[0]), (0, 0)))

    h, h2, h4 = w1.shape[1], w2.shape[1], w3.shape[1]
    out_dim = dw3.shape[1]
    hp, hp2, hp4, outp = rnd(h), rnd(h2), rnd(h4), rnd(out_dim)

    w1p = pad_cols(w1, hp)
    w2p = pad_cols(pad_rows(w2, hp), hp2)
    w3p = pad_cols(pad_rows(w3, hp2), hp4)
    w4p = pad_cols(pad_rows(w4, hp2), hp4)
    w34p = jnp.concatenate([w3p, w4p], axis=1)        # fused mu | log-sigma head
    dw1p = pad_cols(pad_rows(dw1, hp4), hp2)
    dw2p = pad_cols(pad_rows(dw2, hp2), hp)
    dw3p = pad_cols(pad_rows(dw3, hp), outp)

    b_all = jnp.concatenate([
        pad_cols(b1, hp), pad_cols(b2, hp2),
        pad_cols(b3, hp4), pad_cols(b4, hp4),
        pad_cols(db1, hp2), pad_cols(db2, hp),
        pad_cols(db3, outp)], axis=1)                  # (1, 7*128) lane-aligned

    prepared = (w1p, w2p, w34p, dw1p, dw2p, dw3p, b_all)
    return jax.tree_util.tree_map(jax.device_put, prepared), h4


def nodlink_decoder_forward(x, eps, prepared, *, h4, num_blocks=1):
    """Forward pass on pre-padded/fused params.

    x:   (B, in_dim) f32
    eps: (B, hp4)    f32  N(0,1) noise at the padded latent width (extra lanes
                          are ignored by construction of the padded decoder).
    Returns (out_padded (B, out_pad), kl scalar). out_padded columns >= out_dim
    are exactly zero; slice outside if the unpadded width is needed.
    """
    (w1p, w2p, w34p, dw1p, dw2p, dw3p, b_all) = prepared
    B, in_dim = x.shape
    hp4 = w34p.shape[1] // 2
    out_pad = dw3p.shape[1]
    assert B % num_blocks == 0
    tb = B // num_blocks

    row_map = lambda i: (i, 0)   # batch-tiled operands
    rep_map = lambda i: (0, 0)   # operands resident across the grid

    weights = (w1p, w2p, w34p, dw1p, dw2p, dw3p)
    in_specs = [pl.BlockSpec((tb, in_dim), row_map),
                pl.BlockSpec((tb, hp4), row_map),
                pl.BlockSpec(b_all.shape, rep_map)]
    in_specs += [pl.BlockSpec(w.shape, rep_map) for w in weights]

    out_specs = (pl.BlockSpec((tb, out_pad), row_map),
                 pl.BlockSpec((8, 128), row_map))
    out_shape = (jax.ShapeDtypeStruct((B, out_pad), jnp.float32),
                 jax.ShapeDtypeStruct((num_blocks * 8, 128), jnp.float32))

    out_p, kl_slab = pl.pallas_call(
        functools.partial(nodlink_kernel, h4=h4),
        out_shape=out_shape,
        grid_spec=pl.GridSpec(grid=(num_blocks,),
                              in_specs=in_specs,
                              out_specs=out_specs),
        compiler_params=pltpu.CompilerParams(
            dimension_semantics=("parallel",),
            vmem_limit_bytes=32 * 1024 * 1024),
    )(x, eps, b_all, *weights)

    kl = jnp.sum(kl_slab)        # only [8*i, 0] entries are non-zero
    return out_p, kl


def init_params(key, in_dim, out_dim):
    """Deterministic synthetic init. Weight layout: [in_features, out_features]."""
    h = in_dim // 2
    h2 = h // 2
    h4 = h // 4
    dims = [
        (in_dim, h),   # encoder.linear1
        (h, h2),       # encoder.linear2
        (h2, h4),      # encoder.linear3 (mu)
        (h2, h4),      # encoder.linear4 (log-sigma, exp'd)
        (h4, h2),      # decoder.linear1
        (h2, h),       # decoder.linear2
        (h, out_dim),  # decoder.linear3
    ]
    params = []
    for (fan_in, fan_out) in dims:
        key, kw, kb = jax.random.split(key, 3)
        bound = 1.0 / jnp.sqrt(fan_in)
        w = jax.random.uniform(kw, (fan_in, fan_out), jnp.float32, -bound, bound)
        b = jax.random.uniform(kb, (1, fan_out), jnp.float32, -bound, bound)
        params += [w, b]
    return params


def reference_forward(x, eps, params):
    (w1, b1, w2, b2, w3, b3, w4, b4,
     dw1, db1, dw2, db2, dw3, db3) = params
    h = jax.nn.relu(x @ w1 + b1)
    h = jax.nn.relu(h @ w2 + b2)
    mu = h @ w3 + b3
    sigma = jnp.exp(h @ w4 + b4)
    z = mu + sigma * eps
    kl = jnp.sum(sigma ** 2 + mu ** 2 - jnp.log(sigma) - 0.5)
    d = jax.nn.relu(z @ dw1 + db1)
    d = jax.nn.relu(d @ dw2 + db2)
    return d @ dw3 + db3, kl


if __name__ == "__main__":
    key = jax.random.PRNGKey(0)
    B, in_dim, out_dim = 64, 64, 64        # h_dim=32, h_dim//2=16, h_dim//4=8
    h4 = (in_dim // 2) // 4
    hp4 = 128                               # padded latent width (lane-aligned)

    key, kx, keps, kp = jax.random.split(key, 4)
    x = jax.random.normal(kx, (B, in_dim), jnp.float32)
    eps = jax.random.normal(keps, (B, hp4), jnp.float32)   # N(0,1) reparam noise
    params = init_params(kp, in_dim, out_dim)

    # One-time parameter prep (fusion + lane padding), outside the forward path.
    prepared, h4_prep = prepare_params(params)
    assert h4_prep == h4

    fwd = jax.jit(functools.partial(nodlink_decoder_forward, h4=h4, num_blocks=1))
    out_p, kl = fwd(x, eps, prepared)
    jax.block_until_ready((out_p, kl))

    # Reference uses only the first h4 noise lanes (the rest never reach the
    # output because the padded decoder rows are zero).
    ref_out, ref_kl = reference_forward(x, eps[:, :h4], params)
    assert jnp.allclose(out_p[:, :out_dim], ref_out, atol=1e-4, rtol=1e-4)
    assert jnp.allclose(out_p[:, out_dim:], 0.0)           # padded lanes are exact zeros
    assert jnp.allclose(kl, ref_kl, atol=1e-3, rtol=1e-4)

    print("KERNEL_OK")
</pallas_src>

<mosaic_0001>
module attributes {stable_mosaic.version = 11 : i64} {
  func.func @nodlink_kernel(%arg0: i32, %arg1: memref<64x64xf32, #tpu.memory_space<vmem>>, %arg2: memref<64x128xf32, #tpu.memory_space<vmem>>, %arg3: memref<1x896xf32, #tpu.memory_space<vmem>>, %arg4: memref<64x128xf32, #tpu.memory_space<vmem>>, %arg5: memref<128x128xf32, #tpu.memory_space<vmem>>, %arg6: memref<128x256xf32, #tpu.memory_space<vmem>>, %arg7: memref<128x128xf32, #tpu.memory_space<vmem>>, %arg8: memref<128x128xf32, #tpu.memory_space<vmem>>, %arg9: memref<128x128xf32, #tpu.memory_space<vmem>>, %arg10: memref<64x128xf32, #tpu.memory_space<vmem>>, %arg11: memref<8x128xf32, #tpu.memory_space<vmem>>) attributes {dimension_semantics = [#tpu.dimension_semantics<parallel>], iteration_bounds = array<i64: 1>, scalar_prefetch = 0 : i64, scratch_operands = 0 : i64, tpu.core_type = #tpu.core_type<tc>, window_params = [{transform_indices = @transform_0, window_bounds = array<i64: 64, 64>}, {transform_indices = @transform_1, window_bounds = array<i64: 64, 128>}, {pipeline_mode = #tpu.pipeline_mode<synchronous>, transform_indices = @transform_2, window_bounds = array<i64: 1, 896>}, {pipeline_mode = #tpu.pipeline_mode<synchronous>, transform_indices = @transform_3, window_bounds = array<i64: 64, 128>}, {pipeline_mode = #tpu.pipeline_mode<synchronous>, transform_indices = @transform_4, window_bounds = array<i64: 128, 128>}, {pipeline_mode = #tpu.pipeline_mode<synchronous>, transform_indices = @transform_5, window_bounds = array<i64: 128, 256>}, {pipeline_mode = #tpu.pipeline_mode<synchronous>, transform_indices = @transform_6, window_bounds = array<i64: 128, 128>}, {pipeline_mode = #tpu.pipeline_mode<synchronous>, transform_indices = @transform_7, window_bounds = array<i64: 128, 128>}, {pipeline_mode = #tpu.pipeline_mode<synchronous>, transform_indices = @transform_8, window_bounds = array<i64: 128, 128>}, {transform_indices = @transform_9, window_bounds = array<i64: 64, 128>}, {transform_indices = @transform_10, window_bounds = array<i64: 8, 128>}]} {
    %c0 = arith.constant 0 : index
    %c0_0 = arith.constant 0 : index
    %0 = vector.load %arg3[%c0, %c0_0] : memref<1x896xf32, #tpu.memory_space<vmem>>, vector<1x128xf32>
    %c0_1 = arith.constant 0 : index
    %c128 = arith.constant 128 : index
    %1 = vector.load %arg3[%c0_1, %c128] : memref<1x896xf32, #tpu.memory_space<vmem>>, vector<1x128xf32>
    %c0_2 = arith.constant 0 : index
    %c256 = arith.constant 256 : index
    %2 = vector.load %arg3[%c0_2, %c256] : memref<1x896xf32, #tpu.memory_space<vmem>>, vector<1x256xf32>
    %c0_3 = arith.constant 0 : index
    %c512 = arith.constant 512 : index
    %3 = vector.load %arg3[%c0_3, %c512] : memref<1x896xf32, #tpu.memory_space<vmem>>, vector<1x128xf32>
    %c0_4 = arith.constant 0 : index
    %c640 = arith.constant 640 : index
    %4 = vector.load %arg3[%c0_4, %c640] : memref<1x896xf32, #tpu.memory_space<vmem>>, vector<1x128xf32>
    %c0_5 = arith.constant 0 : index
    %c768 = arith.constant 768 : index
    %5 = vector.load %arg3[%c0_5, %c768] : memref<1x896xf32, #tpu.memory_space<vmem>>, vector<1x128xf32>
    %c0_6 = arith.constant 0 : index
    %c0_7 = arith.constant 0 : index
    %6 = vector.load %arg1[%c0_6, %c0_7] : memref<64x64xf32, #tpu.memory_space<vmem>>, vector<64x64xf32>
    %c0_8 = arith.constant 0 : index
    %c0_9 = arith.constant 0 : index
    %7 = vector.load %arg2[%c0_8, %c0_9] : memref<64x128xf32, #tpu.memory_space<vmem>>, vector<64x128xf32>
    %c0_10 = arith.constant 0 : index
    %c0_11 = arith.constant 0 : index
    %8 = vector.load %arg4[%c0_10, %c0_11] : memref<64x128xf32, #tpu.memory_space<vmem>>, vector<64x128xf32>
    %cst = arith.constant dense<0.000000e+00> : vector<64x128xf32>
    %9 = tpu.matmul %6, %8, %cst {dimension_numbers = #tpu.dot_dimension_numbers<[1], [0], [0], [1], [0, 0, 1, 1], [], []>} : vector<64x64xf32>, vector<64x128xf32>, vector<64x128xf32> -> vector<64x128xf32>
    %10 = vector.broadcast %0 : vector<1x128xf32> to vector<64x128xf32>
    %11 = arith.addf %9, %10 : vector<64x128xf32>
    %cst_12 = arith.constant 0.000000e+00 : f32
    %12 = vector.broadcast %cst_12 : f32 to vector<64x128xf32>
    %13 = arith.maximumf %11, %12 : vector<64x128xf32>
    %c0_13 = arith.constant 0 : index
    %c0_14 = arith.constant 0 : index
    %14 = vector.load %arg5[%c0_13, %c0_14] : memref<128x128xf32, #tpu.memory_space<vmem>>, vector<128x128xf32>
    %cst_15 = arith.constant dense<0.000000e+00> : vector<64x128xf32>
    %15 = tpu.matmul %13, %14, %cst_15 {dimension_numbers = #tpu.dot_dimension_numbers<[1], [0], [0], [1], [0, 0, 1, 1], [], []>} : vector<64x128xf32>, vector<128x128xf32>, vector<64x128xf32> -> vector<64x128xf32>
    %16 = vector.broadcast %1 : vector<1x128xf32> to vector<64x128xf32>
    %17 = arith.addf %15, %16 : vector<64x128xf32>
    %cst_16 = arith.constant 0.000000e+00 : f32
    %18 = vector.broadcast %cst_16 : f32 to vector<64x128xf32>
    %19 = arith.maximumf %17, %18 : vector<64x128xf32>
    %c0_17 = arith.constant 0 : index
    %c0_18 = arith.constant 0 : index
    %20 = vector.load %arg6[%c0_17, %c0_18] : memref<128x256xf32, #tpu.memory_space<vmem>>, vector<128x256xf32>
    %cst_19 = arith.constant dense<0.000000e+00> : vector<64x256xf32>
    %21 = tpu.matmul %19, %20, %cst_19 {dimension_numbers = #tpu.dot_dimension_numbers<[1], [0], [0], [1], [0, 0, 1, 1], [], []>} : vector<64x128xf32>, vector<128x256xf32>, vector<64x256xf32> -> vector<64x256xf32>
    %22 = vector.broadcast %2 : vector<1x256xf32> to vector<64x256xf32>
    %23 = arith.addf %21, %22 : vector<64x256xf32>
    %24 = vector.extract_strided_slice %23 {offsets = [0, 0], sizes = [64, 128], strides = [1, 1]} : vector<64x256xf32> to vector<64x128xf32>
    %25 = vector.extract_strided_slice %23 {offsets = [0, 128], sizes = [64, 128], strides = [1, 1]} : vector<64x256xf32> to vector<64x128xf32>
    %26 = math.exp %25 : vector<64x128xf32>
    %27 = arith.mulf %26, %7 : vector<64x128xf32>
    %28 = arith.addf %24, %27 : vector<64x128xf32>
    %29 = tpu.iota {dimensions = array<i32: 1>} : vector<64x128xi32>
    %c8_i32 = arith.constant 8 : i32
    %30 = vector.broadcast %c8_i32 : i32 to vector<64x128xi32>
    %31 = arith.cmpi slt, %29, %30 : vector<64x128xi32>
    %32 = arith.mulf %26, %26 : vector<64x128xf32>
    %33 = arith.mulf %24, %24 : vector<64x128xf32>
    %34 = arith.addf %32, %33 : vector<64x128xf32>
    %35 = arith.subf %34, %25 : vector<64x128xf32>
    %cst_20 = arith.constant 5.000000e-01 : f32
    %36 = vector.broadcast %cst_20 : f32 to vector<64x128xf32>
    %37 = arith.subf %35, %36 : vector<64x128xf32>
    %cst_21 = arith.constant 0.000000e+00 : f32
    %38 = vector.broadcast %cst_21 : f32 to vector<64x128xf32>
    %39 = arith.select %31, %37, %38 : vector<64x128xi1>, vector<64x128xf32>
    %40 = vector.shape_cast %39 : vector<64x128xf32> to vector<1x64x128xf32>
    %cst_22 = arith.constant dense<0.000000e+00> : vector<1xf32>
    %41 = vector.multi_reduction <add>, %40, %cst_22 [1, 2] : vector<1x64x128xf32> to vector<1xf32>
    %42 = vector.shape_cast %41 : vector<1xf32> to vector<1x1x1xf32>
    %43 = vector.extract %42[0, 0, 0] : f32 from vector<1x1x1xf32>
    %44 = tpu.iota {dimensions = array<i32: 0>} : vector<8x128xi32>
    %45 = tpu.iota {dimensions = array<i32: 1>} : vector<8x128xi32>
    %c0_i32 = arith.constant 0 : i32
    %46 = vector.broadcast %c0_i32 : i32 to vector<8x128xi32>
    %47 = arith.cmpi eq, %44, %46 : vector<8x128xi32>
    %c0_i32_23 = arith.constant 0 : i32
    %48 = vector.broadcast %c0_i32_23 : i32 to vector<8x128xi32>
    %49 = arith.cmpi eq, %45, %48 : vector<8x128xi32>
    %50 = arith.andi %47, %49 : vector<8x128xi1>
    %cst_24 = arith.constant 0.000000e+00 : f32
    %51 = vector.broadcast %43 : f32 to vector<8x128xf32>
    %52 = vector.broadcast %cst_24 : f32 to vector<8x128xf32>
    %53 = arith.select %50, %51, %52 : vector<8x128xi1>, vector<8x128xf32>
    %c0_25 = arith.constant 0 : index
    %c0_26 = arith.constant 0 : index
    %54 = vector.load %arg11[%c0_25, %c0_26] : memref<8x128xf32, #tpu.memory_space<vmem>>, vector<8x128xf32>
    tpu.vector_store %arg11[%c0_25, %c0_26], %53 {strides = array<i32>} : memref<8x128xf32, #tpu.memory_space<vmem>>, vector<8x128xf32>,
    %c0_27 = arith.constant 0 : index
    %c0_28 = arith.constant 0 : index
    %55 = vector.load %arg7[%c0_27, %c0_28] : memref<128x128xf32, #tpu.memory_space<vmem>>, vector<128x128xf32>
    %cst_29 = arith.constant dense<0.000000e+00> : vector<64x128xf32>
    %56 = tpu.matmul %28, %55, %cst_29 {dimension_numbers = #tpu.dot_dimension_numbers<[1], [0], [0], [1], [0, 0, 1, 1], [], []>} : vector<64x128xf32>, vector<128x128xf32>, vector<64x128xf32> -> vector<64x128xf32>
    %57 = vector.broadcast %3 : vector<1x128xf32> to vector<64x128xf32>
    %58 = arith.addf %56, %57 : vector<64x128xf32>
    %cst_30 = arith.constant 0.000000e+00 : f32
    %59 = vector.broadcast %cst_30 : f32 to vector<64x128xf32>
    %60 = arith.maximumf %58, %59 : vector<64x128xf32>
    %c0_31 = arith.constant 0 : index
    %c0_32 = arith.constant 0 : index
    %61 = vector.load %arg8[%c0_31, %c0_32] : memref<128x128xf32, #tpu.memory_space<vmem>>, vector<128x128xf32>
    %cst_33 = arith.constant dense<0.000000e+00> : vector<64x128xf32>
    %62 = tpu.matmul %60, %61, %cst_33 {dimension_numbers = #tpu.dot_dimension_numbers<[1], [0], [0], [1], [0, 0, 1, 1], [], []>} : vector<64x128xf32>, vector<128x128xf32>, vector<64x128xf32> -> vector<64x128xf32>
    %63 = vector.broadcast %4 : vector<1x128xf32> to vector<64x128xf32>
    %64 = arith.addf %62, %63 : vector<64x128xf32>
    %cst_34 = arith.constant 0.000000e+00 : f32
    %65 = vector.broadcast %cst_34 : f32 to vector<64x128xf32>
    %66 = arith.maximumf %64, %65 : vector<64x128xf32>
    %c0_35 = arith.constant 0 : index
    %c0_36 = arith.constant 0 : index
    %67 = vector.load %arg9[%c0_35, %c0_36] : memref<128x128xf32, #tpu.memory_space<vmem>>, vector<128x128xf32>
    %cst_37 = arith.constant dense<0.000000e+00> : vector<64x128xf32>
    %68 = tpu.matmul %66, %67, %cst_37 {dimension_numbers = #tpu.dot_dimension_numbers<[1], [0], [0], [1], [0, 0, 1, 1], [], []>} : vector<64x128xf32>, vector<128x128xf32>, vector<64x128xf32> -> vector<64x128xf32>
    %69 = vector.broadcast %5 : vector<1x128xf32> to vector<64x128xf32>
    %70 = arith.addf %68, %69 : vector<64x128xf32>
    %c0_38 = arith.constant 0 : index
    %c0_39 = arith.constant 0 : index
    %71 = vector.load %arg10[%c0_38, %c0_39] : memref<64x128xf32, #tpu.memory_space<vmem>>, vector<64x128xf32>
    tpu.vector_store %arg10[%c0_38, %c0_39], %70 {strides = array<i32>} : memref<64x128xf32, #tpu.memory_space<vmem>>, vector<64x128xf32>,
    return
  }
  func.func @transform_0(%arg0: i32) -> (i32, i32) {
    %c0_i32 = arith.constant 0 : i32
    %c0_i32_0 = arith.constant 0 : i32
    return %arg0, %c0_i32 : i32, i32
  }
  func.func @transform_1(%arg0: i32) -> (i32, i32) {
    %c0_i32 = arith.constant 0 : i32
    %c0_i32_0 = arith.constant 0 : i32
    return %arg0, %c0_i32 : i32, i32
  }
  func.func @transform_2(%arg0: i32) -> (i32, i32) {
    %c0_i32 = arith.constant 0 : i32
    %c0_i32_0 = arith.constant 0 : i32
    %c0_i32_1 = arith.constant 0 : i32
    return %c0_i32, %c0_i32_0 : i32, i32
  }
  func.func @transform_3(%arg0: i32) -> (i32, i32) {
    %c0_i32 = arith.constant 0 : i32
    %c0_i32_0 = arith.constant 0 : i32
    %c0_i32_1 = arith.constant 0 : i32
    return %c0_i32, %c0_i32_0 : i32, i32
  }
  func.func @transform_4(%arg0: i32) -> (i32, i32) {
    %c0_i32 = arith.constant 0 : i32
    %c0_i32_0 = arith.constant 0 : i32
    %c0_i32_1 = arith.constant 0 : i32
    return %c0_i32, %c0_i32_0 : i32, i32
  }
  func.func @transform_5(%arg0: i32) -> (i32, i32) {
    %c0_i32 = arith.constant 0 : i32
    %c0_i32_0 = arith.constant 0 : i32
    %c0_i32_1 = arith.constant 0 : i32
    return %c0_i32, %c0_i32_0 : i32, i32
  }
  func.func @transform_6(%arg0: i32) -> (i32, i32) {
    %c0_i32 = arith.constant 0 : i32
    %c0_i32_0 = arith.constant 0 : i32
    %c0_i32_1 = arith.constant 0 : i32
    return %c0_i32, %c0_i32_0 : i32, i32
  }
  func.func @transform_7(%arg0: i32) -> (i32, i32) {
    %c0_i32 = arith.constant 0 : i32
    %c0_i32_0 = arith.constant 0 : i32
    %c0_i32_1 = arith.constant 0 : i32
    return %c0_i32, %c0_i32_0 : i32, i32
  }
  func.func @transform_8(%arg0: i32) -> (i32, i32) {
    %c0_i32 = arith.constant 0 : i32
    %c0_i32_0 = arith.constant 0 : i32
    %c0_i32_1 = arith.constant 0 : i32
    return %c0_i32, %c0_i32_0 : i32, i32
  }
  func.func @transform_9(%arg0: i32) -> (i32, i32) {
    %c0_i32 = arith.constant 0 : i32
    %c0_i32_0 = arith.constant 0 : i32
    return %arg0, %c0_i32 : i32, i32
  }
  func.func @transform_10(%arg0: i32) -> (i32, i32) {
    %c0_i32 = arith.constant 0 : i32
    %c0_i32_0 = arith.constant 0 : i32
    return %arg0, %c0_i32 : i32, i32
  }
}

</mosaic_0001>

<llo_original>
// kernel: nodlink_decoder_forward.1
$region0: #{nodlink_decoder_forward.1}
  #allocation0 [shape = 'u32[]', space=smem, size = 0x4, offset = 0x4, fixed_abs, tag = 'smem constant byte address 0x4 - core index']
  #allocation1 [shape = 'u32[144,128]{1,0:T(1,128)}', space=vmem, size = 0x12000, scoped, tag = 'internal scratch']
  %s0 = inlined_call_operand.hbm [shape: f32[64,64], index: 0, kind: input, shape index: {}]
  %s1 = inlined_call_operand.hbm [shape: f32[64,128], index: 1, kind: input, shape index: {}]
  %s2 = inlined_call_operand.vmem [shape: f32[1,896], index: 2, kind: input, shape index: {}]
  %s3 = inlined_call_operand.hbm [shape: f32[64,128], index: 3, kind: input, shape index: {}]
  %s4 = inlined_call_operand.hbm [shape: f32[128,128], index: 4, kind: input, shape index: {}]
  %s5 = inlined_call_operand.hbm [shape: f32[128,256], index: 5, kind: input, shape index: {}]
  %s6 = inlined_call_operand.hbm [shape: f32[128,128], index: 6, kind: input, shape index: {}]
  %s7 = inlined_call_operand.hbm [shape: f32[128,128], index: 7, kind: input, shape index: {}]
  %s8 = inlined_call_operand.hbm [shape: f32[128,128], index: 8, kind: input, shape index: {}]
  %s9 = inlined_call_operand.hbm [shape: f32[64,128], index: 9, kind: output, shape index: {0}]
  %s10 = inlined_call_operand.vmem [shape: f32[8,128], index: 10, kind: output, shape index: {1}]
  %11 = xla_tuple %s9, %s10
  %s12 = sld [smem:[#allocation0]]
  $region86: #{nodlink_decoder_forward.1} parent=0
    _
  %s14 = ssub.s32 1, %s12
  %s15 = scalar_select 0, %s14, %s12
  $region1: #{nodlink_decoder_forward.1} parent=0
    #allocation2 [shape = 'u8[32768]{0}', space=vmem, size = 0x8000, scoped, tag = 'input window, operand 0, single buffered']
    #allocation3 [shape = 's32[1]{0}', space=sflag, size = 0x4, scoped, tag = 'scoped memory for nodlink_decoder_forward.1']
    #allocation4 [shape = 's32[1]{0}', space=sflag, size = 0x4, scoped, tag = 'scoped memory for nodlink_decoder_forward.1']
    #allocation5 [shape = 'u8[32768]{0}', space=vmem, size = 0x8000, scoped, tag = 'input window, operand 1, single buffered']
    #allocation6 [shape = 's32[1]{0}', space=sflag, size = 0x4, scoped, tag = 'scoped memory for nodlink_decoder_forward.1']
    #allocation7 [shape = 'u8[32768]{0}', space=vmem, size = 0x8000, scoped, tag = 'input window, operand 3, single buffered']
    #allocation8 [shape = 'u8[65536]{0}', space=vmem, size = 0x10000, scoped, tag = 'input window, operand 4, single buffered']
    #allocation9 [shape = 's32[1]{0}', space=sflag, size = 0x4, scoped, tag = 'scoped memory for nodlink_decoder_forward.1']
    #allocation10 [shape = 'u8[131072]{0}', space=vmem, size = 0x20000, scoped, tag = 'input window, operand 5, single buffered']
    #allocation11 [shape = 'u8[65536]{0}', space=vmem, size = 0x10000, scoped, tag = 'input window, operand 6, single buffered']
    #allocation12 [shape = 's32[1]{0}', space=sflag, size = 0x4, scoped, tag = 'scoped memory for nodlink_decoder_forward.1']
    #allocation13 [shape = 'u8[65536]{0}', space=vmem, size = 0x10000, scoped, tag = 'input window, operand 7, single buffered']
    #allocation14 [shape = 'u8[65536]{0}', space=vmem, size = 0x10000, scoped, tag = 'input window, operand 8, single buffered']
    #allocation15 [shape = 's32[1]{0}', space=sflag, size = 0x4, scoped, tag = 'scoped memory for nodlink_decoder_forward.1']
    #allocation16 [shape = 'u8[32768]{0}', space=vmem, size = 0x8000, scoped, tag = 'output window, operand 0, single buffered']
    %16 = vsyncpa [#allocation3], 0
    %17 = vsyncpa [#allocation6], 0
    %18 = vsyncpa [#allocation9], 0
    %19 = vsyncpa [#allocation12], 0
    %20 = vsyncpa [#allocation15], 0
    %21 = vsyncpa [#allocation4], 0
    // Predicated region
    $region2: #{nodlink_decoder_forward.1} parent=1 // pred_check
      _
    $region3: #{nodlink_decoder_forward.1} parent=1 // pred_check_branch
      %23 = sbr.rel (0) target = $region5
    $region4: #{nodlink_decoder_forward.1} parent=1 // pred_region
      %s25 = ssub.s32 1024, 1024
      %26 = vsyncadd [#allocation3], %s25
      %s27 = sshll.u32 [#allocation2], 4
      %s28 = int_to_ptr.vmem [resolvable:$true] %s27
      %33 = dma.hbm_to_vmem [thread:$0]  %s0, 1024, %s28, [#allocation3], 128, 128, 8
    $region5: #{nodlink_decoder_forward.1} parent=1 // pred_fallthru
      _
    // Predicated region
    $region6: #{nodlink_decoder_forward.1} parent=1 // pred_check
      _
    $region7: #{nodlink_decoder_forward.1} parent=1 // pred_check_branch
      %35 = sbr.rel (0) target = $region9
    $region8: #{nodlink_decoder_forward.1} parent=1 // pred_region
      %s37 = ssub.s32 1024, 1024
      %38 = vsyncadd [#allocation6], %s37
      %s39 = sshll.u32 [#allocation5], 4
      %s40 = int_to_ptr.vmem [resolvable:$true] %s39
      %45 = dma.hbm_to_vmem [thread:$0]  %s1, 1024, %s40, [#allocation6], 128, 128, 8
    $region9: #{nodlink_decoder_forward.1} parent=1 // pred_fallthru
      _
    // Predicated region
    $region10: #{nodlink_decoder_forward.1} parent=1 // pred_check
      _
    $region11: #{nodlink_decoder_forward.1} parent=1 // pred_check_branch
      %47 = sbr.rel (0) target = $region13
    $region12: #{nodlink_decoder_forward.1} parent=1 // pred_region
      _
    $region13: #{nodlink_decoder_forward.1} parent=1 // pred_fallthru
      _
    // Predicated region
    $region14: #{nodlink_decoder_forward.1} parent=1 // pred_check
      _
    $region15: #{nodlink_decoder_forward.1} parent=1 // pred_check_branch
      %49 = sbr.rel (0) target = $region17
    $region16: #{nodlink_decoder_forward.1} parent=1 // pred_region
      %s51 = ssub.s32 1024, 1024
      %52 = vsyncadd [#allocation6], %s51
      %s53 = sshll.u32 [#allocation7], 4
      %s54 = int_to_ptr.vmem [resolvable:$true] %s53
      %59 = dma.hbm_to_vmem [thread:$0]  %s3, 1024, %s54, [#allocation6], 128, 128, 8
    $region17: #{nodlink_decoder_forward.1} parent=1 // pred_fallthru
      _
    // Predicated region
    $region18: #{nodlink_decoder_forward.1} parent=1 // pred_check
      _
    $region19: #{nodlink_decoder_forward.1} parent=1 // pred_check_branch
      %61 = sbr.rel (0) target = $region21
    $region20: #{nodlink_decoder_forward.1} parent=1 // pred_region
      %s63 = ssub.s32 2048, 2048
      %64 = vsyncadd [#allocation9], %s63
      %s65 = sshll.u32 [#allocation8], 4
      %s66 = int_to_ptr.vmem [resolvable:$true] %s65
      %71 = dma.hbm_to_vmem [thread:$0]  %s4, 2048, %s66, [#allocation9], 128, 128, 8
    $region21: #{nodlink_decoder_forward.1} parent=1 // pred_fallthru
      _
    // Predicated region
    $region22: #{nodlink_decoder_forward.1} parent=1 // pred_check
      _
    $region23: #{nodlink_decoder_forward.1} parent=1 // pred_check_branch
      %73 = sbr.rel (0) target = $region25
    $region24: #{nodlink_decoder_forward.1} parent=1 // pred_region
      %s75 = ssub.s32 4096, 4096
      %76 = vsyncadd [#allocation9], %s75
      %s77 = sshll.u32 [#allocation10], 4
      %s78 = int_to_ptr.vmem [resolvable:$true] %s77
      %83 = dma.hbm_to_vmem [thread:$0]  %s5, 4096, %s78, [#allocation9], 256, 256, 16
    $region25: #{nodlink_decoder_forward.1} parent=1 // pred_fallthru
      _
    // Predicated region
    $region26: #{nodlink_decoder_forward.1} parent=1 // pred_check
      _
    $region27: #{nodlink_decoder_forward.1} parent=1 // pred_check_branch
      %85 = sbr.rel (0) target = $region29
    $region28: #{nodlink_decoder_forward.1} parent=1 // pred_region
      %s87 = ssub.s32 2048, 2048
      %88 = vsyncadd [#allocation12], %s87
      %s89 = sshll.u32 [#allocation11], 4
      %s90 = int_to_ptr.vmem [resolvable:$true] %s89
      %95 = dma.hbm_to_vmem [thread:$0]  %s6, 2048, %s90, [#allocation12], 128, 128, 8
    $region29: #{nodlink_decoder_forward.1} parent=1 // pred_fallthru
      _
    // Predicated region
    $region30: #{nodlink_decoder_forward.1} parent=1 // pred_check
      _
    $region31: #{nodlink_decoder_forward.1} parent=1 // pred_check_branch
      %97 = sbr.rel (0) target = $region33
    $region32: #{nodlink_decoder_forward.1} parent=1 // pred_region
      %s99 = ssub.s32 2048, 2048
      %100 = vsyncadd [#allocation12], %s99
      %s101 = sshll.u32 [#allocation13], 4
      %s102 = int_to_ptr.vmem [resolvable:$true] %s101
      %107 = dma.hbm_to_vmem [thread:$0]  %s7, 2048, %s102, [#allocation12], 128, 128, 8
    $region33: #{nodlink_decoder_forward.1} parent=1 // pred_fallthru
      _
    // Predicated region
    $region34: #{nodlink_decoder_forward.1} parent=1 // pred_check
      _
    $region35: #{nodlink_decoder_forward.1} parent=1 // pred_check_branch
      %109 = sbr.rel (0) target = $region37
    $region36: #{nodlink_decoder_forward.1} parent=1 // pred_region
      %s111 = ssub.s32 2048, 2048
      %112 = vsyncadd [#allocation15], %s111
      %s113 = sshll.u32 [#allocation14], 4
      %s114 = int_to_ptr.vmem [resolvable:$true] %s113
      %119 = dma.hbm_to_vmem [thread:$0]  %s8, 2048, %s114, [#allocation15], 128, 128, 8
    $region37: #{nodlink_decoder_forward.1} parent=1 // pred_fallthru
      _
    // Predicated region
    $region38: #{nodlink_decoder_forward.1} parent=1 // pred_check
      _
    $region39: #{nodlink_decoder_forward.1} parent=1 // pred_check_branch
      %121 = sbr.rel (0) target = $region41
    $region40: #{nodlink_decoder_forward.1} parent=1 // pred_region
      %122 = dma.done [#allocation3], 1024
    $region41: #{nodlink_decoder_forward.1} parent=1 // pred_fallthru
      _
    // Predicated region
    $region42: #{nodlink_decoder_forward.1} parent=1 // pred_check
      _
    $region43: #{nodlink_decoder_forward.1} parent=1 // pred_check_branch
      %124 = sbr.rel (0) target = $region45
    $region44: #{nodlink_decoder_forward.1} parent=1 // pred_region
      %125 = dma.done [#allocation6], 1024
    $region45: #{nodlink_decoder_forward.1} parent=1 // pred_fallthru
      _
    // Predicated region
    $region46: #{nodlink_decoder_forward.1} parent=1 // pred_check
      _
    $region47: #{nodlink_decoder_forward.1} parent=1 // pred_check_branch
      %127 = sbr.rel (0) target = $region49
    $region48: #{nodlink_decoder_forward.1} parent=1 // pred_region
      %128 = dma.done [#allocation6], 1024
    $region49: #{nodlink_decoder_forward.1} parent=1 // pred_fallthru
      _
    // Predicated region
    $region50: #{nodlink_decoder_forward.1} parent=1 // pred_check
      _
    $region51: #{nodlink_decoder_forward.1} parent=1 // pred_check_branch
      %130 = sbr.rel (0) target = $region53
    $region52: #{nodlink_decoder_forward.1} parent=1 // pred_region
      %131 = dma.done [#allocation9], 2048
    $region53: #{nodlink_decoder_forward.1} parent=1 // pred_fallthru
      _
    // Predicated region
    $region54: #{nodlink_decoder_forward.1} parent=1 // pred_check
      _
    $region55: #{nodlink_decoder_forward.1} parent=1 // pred_check_branch
      %133 = sbr.rel (0) target = $region57
    $region56: #{nodlink_decoder_forward.1} parent=1 // pred_region
      %134 = dma.done [#allocation9], 4096
    $region57: #{nodlink_decoder_forward.1} parent=1 // pred_fallthru
      _
    // Predicated region
    $region58: #{nodlink_decoder_forward.1} parent=1 // pred_check
      _
    $region59: #{nodlink_decoder_forward.1} parent=1 // pred_check_branch
      %136 = sbr.rel (0) target = $region61
    $region60: #{nodlink_decoder_forward.1} parent=1 // pred_region
      %137 = dma.done [#allocation12], 2048
    $region61: #{nodlink_decoder_forward.1} parent=1 // pred_fallthru
      _
    // Predicated region
    $region62: #{nodlink_decoder_forward.1} parent=1 // pred_check
      _
    $region63: #{nodlink_decoder_forward.1} parent=1 // pred_check_branch
      %139 = sbr.rel (0) target = $region65
    $region64: #{nodlink_decoder_forward.1} parent=1 // pred_region
      %140 = dma.done [#allocation12], 2048
    $region65: #{nodlink_decoder_forward.1} parent=1 // pred_fallthru
      _
    // Predicated region
    $region66: #{nodlink_decoder_forward.1} parent=1 // pred_check
      _
    $region67: #{nodlink_decoder_forward.1} parent=1 // pred_check_branch
      %142 = sbr.rel (0) target = $region69
    $region68: #{nodlink_decoder_forward.1} parent=1 // pred_region
      %143 = dma.done [#allocation15], 2048
    $region69: #{nodlink_decoder_forward.1} parent=1 // pred_fallthru
      _
    %v144 = vld [vmem:[%s2] sm:$0x1]
    %v145 = vld [vmem:[%s2 + $0x1] sm:$0x1]
    %v146 = vld [vmem:[%s2 + $0x2] sm:$0x3]
    %v147 = vld [vmem:[%s2 + $0x4] sm:$0x1]
    %v148 = vld [vmem:[%s2 + $0x5] sm:$0x1]
    %v149 = vld [vmem:[%s2 + $0x6] sm:$0x1]
    %v150 = vld [vmem:[#allocation2] sm:$0xff]
    %v151 = vld [vmem:[#allocation2 + $0x8] sm:$0xff]
    %v152 = vld [vmem:[#allocation2 + $0x10] sm:$0xff]
    %v153 = vld [vmem:[#allocation2 + $0x18] sm:$0xff]
    %v154 = vld [vmem:[#allocation2 + $0x20] sm:$0xff]
    %v155 = vld [vmem:[#allocation2 + $0x28] sm:$0xff]
    %v156 = vld [vmem:[#allocation2 + $0x30] sm:$0xff]
    %v157 = vld [vmem:[#allocation2 + $0x38] sm:$0xff]
    %v158 = vld [vmem:[#allocation5] sm:$0xff]
    %v159 = vld [vmem:[#allocation5 + $0x8] sm:$0xff]
    %v160 = vld [vmem:[#allocation5 + $0x10] sm:$0xff]
    %v161 = vld [vmem:[#allocation5 + $0x18] sm:$0xff]
    %v162 = vld [vmem:[#allocation5 + $0x20] sm:$0xff]
    %v163 = vld [vmem:[#allocation5 + $0x28] sm:$0xff]
    %v164 = vld [vmem:[#allocation5 + $0x30] sm:$0xff]
    %v165 = vld [vmem:[#allocation5 + $0x38] sm:$0xff]
    %v166 = vld [vmem:[#allocation7] sm:$0xff]
    %v167 = vld [vmem:[#allocation7 + $0x8] sm:$0xff]
    %v168 = vld [vmem:[#allocation7 + $0x10] sm:$0xff]
    %v169 = vld [vmem:[#allocation7 + $0x18] sm:$0xff]
    %v170 = vld [vmem:[#allocation7 + $0x20] sm:$0xff]
    %v171 = vld [vmem:[#allocation7 + $0x28] sm:$0xff]
    %v172 = vld [vmem:[#allocation7 + $0x30] sm:$0xff]
    %v173 = vld [vmem:[#allocation7 + $0x38] sm:$0xff]
    %v175 = vlaneseq
    %v176 = vshrl.u32 %v175, 7
    %v177 = vsub.s32 0, %v176
    %v178 = vrot.slane %v144, %v177
    %vm180 = vcmask 523264
    %v182 = vsel %vm180, %v150, 0
    %v185 = vsel %vm180, %v151, 0
    %v188 = vsel %vm180, %v152, 0
    %v191 = vsel %vm180, %v153, 0
    %v194 = vsel %vm180, %v154, 0
    %v197 = vsel %vm180, %v155, 0
    %v200 = vsel %vm180, %v156, 0
    %v203 = vsel %vm180, %v157, 0
    %205 = vmatprep.subr.mxu0 0.0
    %206 = vmatpush1.msra.mxu0 %v166
    %207 = vmatprep.subr.mxu0 0.0
    %208 = vmatpush1.msra.mxu0 %v167
    %209 = vmatprep.subr.mxu0 0.0
    %210 = vmatpush1.msra.mxu0 %v168
    %211 = vmatprep.subr.mxu0 0.0
    %212 = vmatpush1.msra.mxu0 %v169
    %213 = vmatprep.subr.mxu0 0.0
    %214 = vmatpush1.msra.mxu0 %v170
    %215 = vmatprep.subr.mxu0 0.0
    %216 = vmatpush1.msra.mxu0 %v171
    %217 = vmatprep.subr.mxu0 0.0
    %218 = vmatpush1.msra.mxu0 %v172
    %219 = vmatprep.subr.mxu0 0.0
    %220 = vmatpush1.msra.mxu0 %v173
    %221 = vmatprep.subr.mxu0 0.0
    %222 = vmatpush1.msra.mxu0 0.0
    %223 = vmatprep.subr.mxu0 0.0
    %224 = vmatpush1.msra.mxu0 0.0
    %225 = vmatprep.subr.mxu0 0.0
    %226 = vmatpush1.msra.mxu0 0.0
    %227 = vmatprep.subr.mxu0 0.0
    %228 = vmatpush1.msra.mxu0 0.0
    %229 = vmatprep.subr.mxu0 0.0
    %230 = vmatpush1.msra.mxu0 0.0
    %231 = vmatprep.subr.mxu0 0.0
    %232 = vmatpush1.msra.mxu0 0.0
    %233 = vmatprep.subr.mxu0 0.0
    %234 = vmatpush1.msra.mxu0 0.0
    %235 = vmatprep.subr.mxu0 0.0
    %236 = vmatpush1.msra.mxu0 0.0
    %237 = vmatprep.subr.mxu0 0.0
    %238 = vmatpush1.msra.mxu0 0.0
    %239 = vmatprep.subr.mxu0 0.0
    %240 = vmatpush1.msra.mxu0 0.0
    %241 = vmatprep.subr.mxu0 0.0
    %242 = vmatpush1.msra.mxu0 0.0
    %243 = vmatprep.subr.mxu0 0.0
    %244 = vmatpush1.msra.mxu0 0.0
    %245 = vmatprep.subr.mxu0 0.0
    %246 = vmatpush1.msra.mxu0 0.0
    %247 = vmatprep.subr.mxu0 0.0
    %248 = vmatpush1.msra.mxu0 0.0
    %249 = vmatprep.subr.mxu0 0.0
    %250 = vmatpush1.msra.mxu0 0.0
    %251 = vmatprep.subr.mxu0 0.0
    %252 = vmatpush1.msra.mxu0 0.0
    %253 = vmatprep.subr.mxu0 0.0
    %254 = vmatpush1.msra.mxu0 0.0
    %255 = vmatprep.subr.mxu0 0.0
    %256 = vmatpush1.msra.mxu0 0.0
    %257 = vmatprep.subr.mxu0 0.0
    %258 = vmatpush1.msra.mxu0 0.0
    %259 = vmatprep.subr.mxu0 0.0
    %260 = vmatpush1.msra.mxu0 0.0
    %261 = vmatprep.subr.mxu0 0.0
    %262 = vmatpush1.msra.mxu0 0.0
    %263 = vmatprep.subr.mxu0 0.0
    %264 = vmatpush1.msra.mxu0 0.0
    %265 = vmatprep.subr.mxu0 0.0
    %266 = vmatpush1.msra.mxu0 0.0
    %267 = vmatprep.subr.mxu0 0.0
    %268 = vmatpush1.msra.mxu0 0.0
    %269 = vmatprep.mubr.f32.mxu0 0.0
    %270 = vmatmul.mubr.f32.gmra.mrb[0].mxu0 %v182
    %v271 = vpop.f32.mrb[0].mxu0
    %v272 = vadd.f32 %v178, %v271
    %v273 = vpop.f32.mrb[0].mxu0
    %274 = vmatprep.mubr.f32.mxu0 0.0
    %275 = vmatmul.mubr.f32.gmra.mrb[0].mxu0 %v185
    %v276 = vpop.f32.mrb[0].mxu0
    %v277 = vadd.f32 %v178, %v276
    %v278 = vpop.f32.mrb[0].mxu0
    %279 = vmatprep.mubr.f32.mxu0 0.0
    %280 = vmatmul.mubr.f32.gmra.mrb[0].mxu0 %v188
    %v281 = vpop.f32.mrb[0].mxu0
    %v282 = vadd.f32 %v178, %v281
    %v283 = vpop.f32.mrb[0].mxu0
    %284 = vmatprep.mubr.f32.mxu0 0.0
    %285 = vmatmul.mubr.f32.gmra.mrb[0].mxu0 %v191
    %v286 = vpop.f32.mrb[0].mxu0
    %v287 = vadd.f32 %v178, %v286
    %v288 = vpop.f32.mrb[0].mxu0
    %289 = vmatprep.mubr.f32.mxu0 0.0
    %290 = vmatmul.mubr.f32.gmra.mrb[0].mxu0 %v194
    %v291 = vpop.f32.mrb[0].mxu0
    %v292 = vadd.f32 %v178, %v291
    %v293 = vpop.f32.mrb[0].mxu0
    %294 = vmatprep.mubr.f32.mxu0 0.0
    %295 = vmatmul.mubr.f32.gmra.mrb[0].mxu0 %v197
    %v296 = vpop.f32.mrb[0].mxu0
    %v297 = vadd.f32 %v178, %v296
    %v298 = vpop.f32.mrb[0].mxu0
    %299 = vmatprep.mubr.f32.mxu0 0.0
    %300 = vmatmul.mubr.f32.gmra.mrb[0].mxu0 %v200
    %v301 = vpop.f32.mrb[0].mxu0
    %v302 = vadd.f32 %v178, %v301
    %v303 = vpop.f32.mrb[0].mxu0
    %304 = vmatprep.mubr.f32.mxu0 0.0
    %305 = vmatmul.mubr.f32.gmra.mrb[0].mxu0 %v203
    %v306 = vpop.f32.mrb[0].mxu0
    %v307 = vadd.f32 %v178, %v306
    %v308 = vpop.f32.mrb[0].mxu0
    %309 = vdwg.mxu0
    %v310 = vmax.f32 %v272, 0.0
    %v311 = vmax.f32 %v277, 0.0
    %v312 = vmax.f32 %v282, 0.0
    %v313 = vmax.f32 %v287, 0.0
    %v314 = vmax.f32 %v292, 0.0
    %v315 = vmax.f32 %v297, 0.0
    %v316 = vmax.f32 %v302, 0.0
    %v317 = vmax.f32 %v307, 0.0
    %v318 = vld [vmem:[#allocation8] sm:$0xff]
    %v319 = vld [vmem:[#allocation8 + $0x8] sm:$0xff]
    %v320 = vld [vmem:[#allocation8 + $0x10] sm:$0xff]
    %v321 = vld [vmem:[#allocation8 + $0x18] sm:$0xff]
    %v322 = vld [vmem:[#allocation8 + $0x20] sm:$0xff]
    %v323 = vld [vmem:[#allocation8 + $0x28] sm:$0xff]
    %v324 = vld [vmem:[#allocation8 + $0x30] sm:$0xff]
    %v325 = vld [vmem:[#allocation8 + $0x38] sm:$0xff]
    %v326 = vld [vmem:[#allocation8 + $0x40] sm:$0xff]
    %v327 = vld [vmem:[#allocation8 + $0x48] sm:$0xff]
    %v328 = vld [vmem:[#allocation8 + $0x50] sm:$0xff]
    %v329 = vld [vmem:[#allocation8 + $0x58] sm:$0xff]
    %v330 = vld [vmem:[#allocation8 + $0x60] sm:$0xff]
    %v331 = vld [vmem:[#allocation8 + $0x68] sm:$0xff]
    %v332 = vld [vmem:[#allocation8 + $0x70] sm:$0xff]
    %v333 = vld [vmem:[#allocation8 + $0x78] sm:$0xff]
    %v335 = vlaneseq
    %v336 = vshrl.u32 %v335, 7
    %v337 = vsub.s32 0, %v336
    %v338 = vrot.slane %v145, %v337
    %340 = vmatprep.subr.mxu0 0.0
    %341 = vmatpush1.msra.mxu0 %v318
    %342 = vmatprep.subr.mxu0 0.0
    %343 = vmatpush1.msra.mxu0 %v319
    %344 = vmatprep.subr.mxu0 0.0
    %345 = vmatpush1.msra.mxu0 %v320
    %346 = vmatprep.subr.mxu0 0.0
    %347 = vmatpush1.msra.mxu0 %v321
    %348 = vmatprep.subr.mxu0 0.0
    %349 = vmatpush1.msra.mxu0 %v322
    %350 = vmatprep.subr.mxu0 0.0
    %351 = vmatpush1.msra.mxu0 %v323
    %352 = vmatprep.subr.mxu0 0.0
    %353 = vmatpush1.msra.mxu0 %v324
    %354 = vmatprep.subr.mxu0 0.0
    %355 = vmatpush1.msra.mxu0 %v325
    %356 = vmatprep.subr.mxu0 0.0
    %357 = vmatpush1.msra.mxu0 %v326
    %358 = vmatprep.subr.mxu0 0.0
    %359 = vmatpush1.msra.mxu0 %v327
    %360 = vmatprep.subr.mxu0 0.0
    %361 = vmatpush1.msra.mxu0 %v328
    %362 = vmatprep.subr.mxu0 0.0
    %363 = vmatpush1.msra.mxu0 %v329
    %364 = vmatprep.subr.mxu0 0.0
    %365 = vmatpush1.msra.mxu0 %v330
    %366 = vmatprep.subr.mxu0 0.0
    %367 = vmatpush1.msra.mxu0 %v331
    %368 = vmatprep.subr.mxu0 0.0
    %369 = vmatpush1.msra.mxu0 %v332
    %370 = vmatprep.subr.mxu0 0.0
    %371 = vmatpush1.msra.mxu0 %v333
    %372 = vmatprep.subr.mxu0 0.0
    %373 = vmatpush1.msra.mxu0 0.0
    %374 = vmatprep.subr.mxu0 0.0
    %375 = vmatpush1.msra.mxu0 0.0
    %376 = vmatprep.subr.mxu0 0.0
    %377 = vmatpush1.msra.mxu0 0.0
    %378 = vmatprep.subr.mxu0 0.0
    %379 = vmatpush1.msra.mxu0 0.0
    %380 = vmatprep.subr.mxu0 0.0
    %381 = vmatpush1.msra.mxu0 0.0
    %382 = vmatprep.subr.mxu0 0.0
    %383 = vmatpush1.msra.mxu0 0.0
    %384 = vmatprep.subr.mxu0 0.0
    %385 = vmatpush1.msra.mxu0 0.0
    %386 = vmatprep.subr.mxu0 0.0
    %387 = vmatpush1.msra.mxu0 0.0
    %388 = vmatprep.subr.mxu0 0.0
    %389 = vmatpush1.msra.mxu0 0.0
    %390 = vmatprep.subr.mxu0 0.0
    %391 = vmatpush1.msra.mxu0 0.0
    %392 = vmatprep.subr.mxu0 0.0
    %393 = vmatpush1.msra.mxu0 0.0
    %394 = vmatprep.subr.mxu0 0.0
    %395 = vmatpush1.msra.mxu0 0.0
    %396 = vmatprep.subr.mxu0 0.0
    %397 = vmatpush1.msra.mxu0 0.0
    %398 = vmatprep.subr.mxu0 0.0
    %399 = vmatpush1.msra.mxu0 0.0
    %400 = vmatprep.subr.mxu0 0.0
    %401 = vmatpush1.msra.mxu0 0.0
    %402 = vmatprep.subr.mxu0 0.0
    %403 = vmatpush1.msra.mxu0 0.0
    %404 = vmatprep.mubr.f32.mxu0 0.0
    %405 = vmatmul.mubr.f32.gmra.mrb[0].mxu0 %v310
    %v406 = vpop.f32.mrb[0].mxu0
    %v407 = vadd.f32 %v338, %v406
    %v408 = vpop.f32.mrb[0].mxu0
    %409 = vmatprep.mubr.f32.mxu0 0.0
    %410 = vmatmul.mubr.f32.gmra.mrb[0].mxu0 %v311
    %v411 = vpop.f32.mrb[0].mxu0
    %v412 = vadd.f32 %v338, %v411
    %v413 = vpop.f32.mrb[0].mxu0
    %414 = vmatprep.mubr.f32.mxu0 0.0
    %415 = vmatmul.mubr.f32.gmra.mrb[0].mxu0 %v312
    %v416 = vpop.f32.mrb[0].mxu0
    %v417 = vadd.f32 %v338, %v416
    %v418 = vpop.f32.mrb[0].mxu0
    %419 = vmatprep.mubr.f32.mxu0 0.0
    %420 = vmatmul.mubr.f32.gmra.mrb[0].mxu0 %v313
    %v421 = vpop.f32.mrb[0].mxu0
    %v422 = vadd.f32 %v338, %v421
    %v423 = vpop.f32.mrb[0].mxu0
    %424 = vmatprep.mubr.f32.mxu0 0.0
    %425 = vmatmul.mubr.f32.gmra.mrb[0].mxu0 %v314
    %v426 = vpop.f32.mrb[0].mxu0
    %v427 = vadd.f32 %v338, %v426
    %v428 = vpop.f32.mrb[0].mxu0
    %429 = vmatprep.mubr.f32.mxu0 0.0
    %430 = vmatmul.mubr.f32.gmra.mrb[0].mxu0 %v315
    %v431 = vpop.f32.mrb[0].mxu0
    %v432 = vadd.f32 %v338, %v431
    %v433 = vpop.f32.mrb[0].mxu0
    %434 = vmatprep.mubr.f32.mxu0 0.0
    %435 = vmatmul.mubr.f32.gmra.mrb[0].mxu0 %v316
    %v436 = vpop.f32.mrb[0].mxu0
    %v437 = vadd.f32 %v338, %v436
    %v438 = vpop.f32.mrb[0].mxu0
    %439 = vmatprep.mubr.f32.mxu0 0.0
    %440 = vmatmul.mubr.f32.gmra.mrb[0].mxu0 %v317
    %v441 = vpop.f32.mrb[0].mxu0
    %v442 = vadd.f32 %v338, %v441
    %v443 = vpop.f32.mrb[0].mxu0
    %444 = vdwg.mxu0
    %v445 = vmax.f32 %v407, 0.0
    %v446 = vmax.f32 %v412, 0.0
    %v447 = vmax.f32 %v417, 0.0
    %v448 = vmax.f32 %v422, 0.0
    %v449 = vmax.f32 %v427, 0.0
    %v450 = vmax.f32 %v432, 0.0
    %v451 = vmax.f32 %v437, 0.0
    %v452 = vmax.f32 %v442, 0.0
    %v453 = vld [vmem:[#allocation10] sm:$0xff]
    %v454 = vld [vmem:[#allocation10 + $0x8] sm:$0xff]
    %v455 = vld [vmem:[#allocation10 + $0x10] sm:$0xff]
    %v456 = vld [vmem:[#allocation10 + $0x18] sm:$0xff]
    %v457 = vld [vmem:[#allocation10 + $0x20] sm:$0xff]
    %v458 = vld [vmem:[#allocation10 + $0x28] sm:$0xff]
    %v459 = vld [vmem:[#allocation10 + $0x30] sm:$0xff]
    %v460 = vld [vmem:[#allocation10 + $0x38] sm:$0xff]
    %v461 = vld [vmem:[#allocation10 + $0x40] sm:$0xff]
    %v462 = vld [vmem:[#allocation10 + $0x48] sm:$0xff]
    %v463 = vld [vmem:[#allocation10 + $0x50] sm:$0xff]
    %v464 = vld [vmem:[#allocation10 + $0x58] sm:$0xff]
    %v465 = vld [vmem:[#allocation10 + $0x60] sm:$0xff]
    %v466 = vld [vmem:[#allocation10 + $0x68] sm:$0xff]
    %v467 = vld [vmem:[#allocation10 + $0x70] sm:$0xff]
    %v468 = vld [vmem:[#allocation10 + $0x78] sm:$0xff]
    %v469 = vld [vmem:[#allocation10 + $0x80] sm:$0xff]
    %v470 = vld [vmem:[#allocation10 + $0x88] sm:$0xff]
    %v471 = vld [vmem:[#allocation10 + $0x90] sm:$0xff]
    %v472 = vld [vmem:[#allocation10 + $0x98] sm:$0xff]
    %v473 = vld [vmem:[#allocation10 + $0xa0] sm:$0xff]
    %v474 = vld [vmem:[#allocation10 + $0xa8] sm:$0xff]
    %v475 = vld [vmem:[#allocation10 + $0xb0] sm:$0xff]
    %v476 = vld [vmem:[#allocation10 + $0xb8] sm:$0xff]
    %v477 = vld [vmem:[#allocation10 + $0xc0] sm:$0xff]
    %v478 = vld [vmem:[#allocation10 + $0xc8] sm:$0xff]
    %v479 = vld [vmem:[#allocation10 + $0xd0] sm:$0xff]
    %v480 = vld [vmem:[#allocation10 + $0xd8] sm:$0xff]
    %v481 = vld [vmem:[#allocation10 + $0xe0] sm:$0xff]
    %v482 = vld [vmem:[#allocation10 + $0xe8] sm:$0xff]
    %v483 = vld [vmem:[#allocation10 + $0xf0] sm:$0xff]
    %v484 = vld [vmem:[#allocation10 + $0xf8] sm:$0xff]
    %v486 = vlaneseq
    %v487 = vshrl.u32 %v486, 7
    %v488 = vsub.s32 0, %v487
    %v489 = vrot.slane %v146, %v488
    %v490 = vlaneseq
    %v491 = vshrl.u32 %v490, 7
    %v492 = vsub.s32 1, %v491
    %v493 = vrot.slane %v146, %v492
    %496 = vmatprep.subr.mxu0 %v454
    %497 = vmatpush1.msra.mxu0 %v453
    %498 = vmatprep.subr.mxu0 %v456
    %499 = vmatpush1.msra.mxu0 %v455
    %500 = vmatprep.subr.mxu0 %v458
    %501 = vmatpush1.msra.mxu0 %v457
    %502 = vmatprep.subr.mxu0 %v460
    %503 = vmatpush1.msra.mxu0 %v459
    %504 = vmatprep.subr.mxu0 %v462
    %505 = vmatpush1.msra.mxu0 %v461
    %506 = vmatprep.subr.mxu0 %v464
    %507 = vmatpush1.msra.mxu0 %v463
    %508 = vmatprep.subr.mxu0 %v466
    %509 = vmatpush1.msra.mxu0 %v465
    %510 = vmatprep.subr.mxu0 %v468
    %511 = vmatpush1.msra.mxu0 %v467
    %512 = vmatprep.subr.mxu0 %v470
    %513 = vmatpush1.msra.mxu0 %v469
    %514 = vmatprep.subr.mxu0 %v472
    %515 = vmatpush1.msra.mxu0 %v471
    %516 = vmatprep.subr.mxu0 %v474
    %517 = vmatpush1.msra.mxu0 %v473
    %518 = vmatprep.subr.mxu0 %v476
    %519 = vmatpush1.msra.mxu0 %v475
    %520 = vmatprep.subr.mxu0 %v478
    %521 = vmatpush1.msra.mxu0 %v477
    %522 = vmatprep.subr.mxu0 %v480
    %523 = vmatpush1.msra.mxu0 %v479
    %524 = vmatprep.subr.mxu0 %v482
    %525 = vmatpush1.msra.mxu0 %v481
    %526 = vmatprep.subr.mxu0 %v484
    %527 = vmatpush1.msra.mxu0 %v483
    %528 = vmatprep.subr.mxu0 0.0
    %529 = vmatpush1.msra.mxu0 0.0
    %530 = vmatprep.subr.mxu0 0.0
    %531 = vmatpush1.msra.mxu0 0.0
    %532 = vmatprep.subr.mxu0 0.0
    %533 = vmatpush1.msra.mxu0 0.0
    %534 = vmatprep.subr.mxu0 0.0
    %535 = vmatpush1.msra.mxu0 0.0
    %536 = vmatprep.subr.mxu0 0.0
    %537 = vmatpush1.msra.mxu0 0.0
    %538 = vmatprep.subr.mxu0 0.0
    %539 = vmatpush1.msra.mxu0 0.0
    %540 = vmatprep.subr.mxu0 0.0
    %541 = vmatpush1.msra.mxu0 0.0
    %542 = vmatprep.subr.mxu0 0.0
    %543 = vmatpush1.msra.mxu0 0.0
    %544 = vmatprep.subr.mxu0 0.0
    %545 = vmatpush1.msra.mxu0 0.0
    %546 = vmatprep.subr.mxu0 0.0
    %547 = vmatpush1.msra.mxu0 0.0
    %548 = vmatprep.subr.mxu0 0.0
    %549 = vmatpush1.msra.mxu0 0.0
    %550 = vmatprep.subr.mxu0 0.0
    %551 = vmatpush1.msra.mxu0 0.0
    %552 = vmatprep.subr.mxu0 0.0
    %553 = vmatpush1.msra.mxu0 0.0
    %554 = vmatprep.subr.mxu0 0.0
    %555 = vmatpush1.msra.mxu0 0.0
    %556 = vmatprep.subr.mxu0 0.0
    %557 = vmatpush1.msra.mxu0 0.0
    %558 = vmatprep.subr.mxu0 0.0
    %559 = vmatpush1.msra.mxu0 0.0
    %560 = vmatprep.mubr.f32.mxu0 0.0
    %561 = vmatmul.mubr.f32.gmra.mrb[0].mxu0 %v445
    %v562 = vpop.f32.mrb[0].mxu0
    %v563 = vadd.f32 %v489, %v562
    %v564 = vpop.f32.mrb[0].mxu0
    %v565 = vadd.f32 %v493, %v564
    %566 = vmatprep.mubr.f32.mxu0 0.0
    %567 = vmatmul.mubr.f32.gmra.mrb[0].mxu0 %v446
    %v568 = vpop.f32.mrb[0].mxu0
    %v569 = vadd.f32 %v489, %v568
    %v570 = vpop.f32.mrb[0].mxu0
    %v571 = vadd.f32 %v493, %v570
    %572 = vmatprep.mubr.f32.mxu0 0.0
    %573 = vmatmul.mubr.f32.gmra.mrb[0].mxu0 %v447
    %v574 = vpop.f32.mrb[0].mxu0
    %v575 = vadd.f32 %v489, %v574
    %v576 = vpop.f32.mrb[0].mxu0
    %v577 = vadd.f32 %v493, %v576
    %578 = vmatprep.mubr.f32.mxu0 0.0
    %579 = vmatmul.mubr.f32.gmra.mrb[0].mxu0 %v448
    %v580 = vpop.f32.mrb[0].mxu0
    %v581 = vadd.f32 %v489, %v580
    %v582 = vpop.f32.mrb[0].mxu0
    %v583 = vadd.f32 %v493, %v582
    %584 = vmatprep.mubr.f32.mxu0 0.0
    %585 = vmatmul.mubr.f32.gmra.mrb[0].mxu0 %v449
    %v586 = vpop.f32.mrb[0].mxu0
    %v587 = vadd.f32 %v489, %v586
    %v588 = vpop.f32.mrb[0].mxu0
    %v589 = vadd.f32 %v493, %v588
    %590 = vmatprep.mubr.f32.mxu0 0.0
    %591 = vmatmul.mubr.f32.gmra.mrb[0].mxu0 %v450
    %v592 = vpop.f32.mrb[0].mxu0
    %v593 = vadd.f32 %v489, %v592
    %v594 = vpop.f32.mrb[0].mxu0
    %v595 = vadd.f32 %v493, %v594
    %596 = vmatprep.mubr.f32.mxu0 0.0
    %597 = vmatmul.mubr.f32.gmra.mrb[0].mxu0 %v451
    %v598 = vpop.f32.mrb[0].mxu0
    %v599 = vadd.f32 %v489, %v598
    %v600 = vpop.f32.mrb[0].mxu0
    %v601 = vadd.f32 %v493, %v600
    %602 = vmatprep.mubr.f32.mxu0 0.0
    %603 = vmatmul.mubr.f32.gmra.mrb[0].mxu0 %v452
    %v604 = vpop.f32.mrb[0].mxu0
    %v605 = vadd.f32 %v489, %v604
    %v606 = vpop.f32.mrb[0].mxu0
    %v607 = vadd.f32 %v493, %v606
    %608 = vdwg.mxu0
    %v609 = vmul.f32 %v565, 1.442695
    %v610 = vpow.pop %v609
    %v611 = vmul.f32 %v571, 1.442695
    %v612 = vpow.pop %v611
    %v613 = vmul.f32 %v577, 1.442695
    %v614 = vpow.pop %v613
    %v615 = vmul.f32 %v583, 1.442695
    %v616 = vpow.pop %v615
    %v617 = vmul.f32 %v589, 1.442695
    %v618 = vpow.pop %v617
    %v619 = vmul.f32 %v595, 1.442695
    %v620 = vpow.pop %v619
    %v621 = vmul.f32 %v601, 1.442695
    %v622 = vpow.pop %v621
    %v623 = vmul.f32 %v607, 1.442695
    %v624 = vpow.pop %v623
    %v625 = vmul.f32 %v610, %v158
    %v626 = vmul.f32 %v612, %v159
    %v627 = vmul.f32 %v614, %v160
    %v628 = vmul.f32 %v616, %v161
    %v629 = vmul.f32 %v618, %v162
    %v630 = vmul.f32 %v620, %v163
    %v631 = vmul.f32 %v622, %v164
    %v632 = vmul.f32 %v624, %v165
    %v633 = vadd.f32 %v563, %v625
    %v634 = vadd.f32 %v569, %v626
    %v635 = vadd.f32 %v575, %v627
    %v636 = vadd.f32 %v581, %v628
    %v637 = vadd.f32 %v587, %v629
    %v638 = vadd.f32 %v593, %v630
    %v639 = vadd.f32 %v599, %v631
    %v640 = vadd.f32 %v605, %v632
    %v641 = vlaneseq
    %v642 = vand.u32 %v641, 127
    %vm643 = vcmp.lt.s32.totalorder %v642, 8
    %v644 = vmul.f32 %v610, %v610
    %v645 = vmul.f32 %v612, %v612
    %v646 = vmul.f32 %v614, %v614
    %v647 = vmul.f32 %v616, %v616
    %v648 = vmul.f32 %v618, %v618
    %v649 = vmul.f32 %v620, %v620
    %v650 = vmul.f32 %v622, %v622
    %v651 = vmul.f32 %v624, %v624
    %v652 = vmul.f32 %v563, %v563
    %v653 = vmul.f32 %v569, %v569
    %v654 = vmul.f32 %v575, %v575
    %v655 = vmul.f32 %v581, %v581
    %v656 = vmul.f32 %v587, %v587
    %v657 = vmul.f32 %v593, %v593
    %v658 = vmul.f32 %v599, %v599
    %v659 = vmul.f32 %v605, %v605
    %v660 = vadd.f32 %v644, %v652
    %v661 = vadd.f32 %v645, %v653
    %v662 = vadd.f32 %v646, %v654
    %v663 = vadd.f32 %v647, %v655
    %v664 = vadd.f32 %v648, %v656
    %v665 = vadd.f32 %v649, %v657
    %v666 = vadd.f32 %v650, %v658
    %v667 = vadd.f32 %v651, %v659
    %v668 = vsub.f32 %v660, %v565
    %v669 = vsub.f32 %v661, %v571
    %v670 = vsub.f32 %v662, %v577
    %v671 = vsub.f32 %v663, %v583
    %v672 = vsub.f32 %v664, %v589
    %v673 = vsub.f32 %v665, %v595
    %v674 = vsub.f32 %v666, %v601
    %v675 = vsub.f32 %v667, %v607
    %v676 = vsub.f32 %v668, 0.5
    %v677 = vsub.f32 %v669, 0.5
    %v678 = vsub.f32 %v670, 0.5
    %v679 = vsub.f32 %v671, 0.5
    %v680 = vsub.f32 %v672, 0.5
    %v681 = vsub.f32 %v673, 0.5
    %v682 = vsub.f32 %v674, 0.5
    %v683 = vsub.f32 %v675, 0.5
    %v684 = vsel %vm643, %v676, 0.0
    %v685 = vsel %vm643, %v677, 0.0
    %v686 = vsel %vm643, %v678, 0.0
    %v687 = vsel %vm643, %v679, 0.0
    %v688 = vsel %vm643, %v680, 0.0
    %v689 = vsel %vm643, %v681, 0.0
    %v690 = vsel %vm643, %v682, 0.0
    %v691 = vsel %vm643, %v683, 0.0
    %v692 = vadd.f32 %v684, %v685
    %v693 = vadd.f32 %v692, %v686
    %v694 = vadd.f32 %v693, %v687
    %v695 = vadd.f32 %v694, %v688
    %v696 = vadd.f32 %v695, %v689
    %v697 = vadd.f32 %v696, %v690
    %v698 = vadd.f32 %v697, %v691
    %699 = vadd.xlane.f32.xlu0 %v698
    %v700 = vpop.xlane.xlu0 %699
    %v701 = vrot.slane %v700, 4
    %v702 = vadd.f32 %v700, %v701
    %v703 = vrot.slane %v702, 2
    %v704 = vadd.f32 %v702, %v703
    %v705 = vrot.slane %v704, 1
    %v706 = vadd.f32 %v704, %v705
    %s707 = vtos %v706
    %v708 = vlaneseq
    %v709 = vshrl.u32 %v708, 7
    %vm710 = vcmp.eq.s32.totalorder %v709, 0
    %vm711 = vcmp.eq.s32.totalorder %v642, 0
    %vm712 = vmand %vm710, %vm711
    %v713 = vstv %s707
    %v714 = vsel %vm712, %v713, 0.0
    %715 = vst [vmem:[%s10] sm:$0xff] %v714
    %v716 = vld [vmem:[#allocation11] sm:$0xff]
    %v717 = vld [vmem:[#allocation11 + $0x8] sm:$0xff]
    %v718 = vld [vmem:[#allocation11 + $0x10] sm:$0xff]
    %v719 = vld [vmem:[#allocation11 + $0x18] sm:$0xff]
    %v720 = vld [vmem:[#allocation11 + $0x20] sm:$0xff]
    %v721 = vld [vmem:[#allocation11 + $0x28] sm:$0xff]
    %v722 = vld [vmem:[#allocation11 + $0x30] sm:$0xff]
    %v723 = vld [vmem:[#allocation11 + $0x38] sm:$0xff]
    %v724 = vld [vmem:[#allocation11 + $0x40] sm:$0xff]
    %v725 = vld [vmem:[#allocation11 + $0x48] sm:$0xff]
    %v726 = vld [vmem:[#allocation11 + $0x50] sm:$0xff]
    %v727 = vld [vmem:[#allocation11 + $0x58] sm:$0xff]
    %v728 = vld [vmem:[#allocation11 + $0x60] sm:$0xff]
    %v729 = vld [vmem:[#allocation11 + $0x68] sm:$0xff]
    %v730 = vld [vmem:[#allocation11 + $0x70] sm:$0xff]
    %v731 = vld [vmem:[#allocation11 + $0x78] sm:$0xff]
    %v733 = vlaneseq
    %v734 = vshrl.u32 %v733, 7
    %v735 = vsub.s32 0, %v734
    %v736 = vrot.slane %v147, %v735
    %738 = vmatprep.subr.mxu0 0.0
    %739 = vmatpush1.msra.mxu0 %v716
    %740 = vmatprep.subr.mxu0 0.0
    %741 = vmatpush1.msra.mxu0 %v717
    %742 = vmatprep.subr.mxu0 0.0
    %743 = vmatpush1.msra.mxu0 %v718
    %744 = vmatprep.subr.mxu0 0.0
    %745 = vmatpush1.msra.mxu0 %v719
    %746 = vmatprep.subr.mxu0 0.0
    %747 = vmatpush1.msra.mxu0 %v720
    %748 = vmatprep.subr.mxu0 0.0
    %749 = vmatpush1.msra.mxu0 %v721
    %750 = vmatprep.subr.mxu0 0.0
    %751 = vmatpush1.msra.mxu0 %v722
    %752 = vmatprep.subr.mxu0 0.0
    %753 = vmatpush1.msra.mxu0 %v723
    %754 = vmatprep.subr.mxu0 0.0
    %755 = vmatpush1.msra.mxu0 %v724
    %756 = vmatprep.subr.mxu0 0.0
    %757 = vmatpush1.msra.mxu0 %v725
    %758 = vmatprep.subr.mxu0 0.0
    %759 = vmatpush1.msra.mxu0 %v726
    %760 = vmatprep.subr.mxu0 0.0
    %761 = vmatpush1.msra.mxu0 %v727
    %762 = vmatprep.subr.mxu0 0.0
    %763 = vmatpush1.msra.mxu0 %v728
    %764 = vmatprep.subr.mxu0 0.0
    %765 = vmatpush1.msra.mxu0 %v729
    %766 = vmatprep.subr.mxu0 0.0
    %767 = vmatpush1.msra.mxu0 %v730
    %768 = vmatprep.subr.mxu0 0.0
    %769 = vmatpush1.msra.mxu0 %v731
    %770 = vmatprep.subr.mxu0 0.0
    %771 = vmatpush1.msra.mxu0 0.0
    %772 = vmatprep.subr.mxu0 0.0
    %773 = vmatpush1.msra.mxu0 0.0
    %774 = vmatprep.subr.mxu0 0.0
    %775 = vmatpush1.msra.mxu0 0.0
    %776 = vmatprep.subr.mxu0 0.0
    %777 = vmatpush1.msra.mxu0 0.0
    %778 = vmatprep.subr.mxu0 0.0
    %779 = vmatpush1.msra.mxu0 0.0
    %780 = vmatprep.subr.mxu0 0.0
    %781 = vmatpush1.msra.mxu0 0.0
    %782 = vmatprep.subr.mxu0 0.0
    %783 = vmatpush1.msra.mxu0 0.0
    %784 = vmatprep.subr.mxu0 0.0
    %785 = vmatpush1.msra.mxu0 0.0
    %786 = vmatprep.subr.mxu0 0.0
    %787 = vmatpush1.msra.mxu0 0.0
    %788 = vmatprep.subr.mxu0 0.0
    %789 = vmatpush1.msra.mxu0 0.0
    %790 = vmatprep.subr.mxu0 0.0
    %791 = vmatpush1.msra.mxu0 0.0
    %792 = vmatprep.subr.mxu0 0.0
    %793 = vmatpush1.msra.mxu0 0.0
    %794 = vmatprep.subr.mxu0 0.0
    %795 = vmatpush1.msra.mxu0 0.0
    %796 = vmatprep.subr.mxu0 0.0
    %797 = vmatpush1.msra.mxu0 0.0
    %798 = vmatprep.subr.mxu0 0.0
    %799 = vmatpush1.msra.mxu0 0.0
    %800 = vmatprep.subr.mxu0 0.0
    %801 = vmatpush1.msra.mxu0 0.0
    %802 = vmatprep.mubr.f32.mxu0 0.0
    %803 = vmatmul.mubr.f32.gmra.mrb[0].mxu0 %v633
    %v804 = vpop.f32.mrb[0].mxu0
    %v805 = vadd.f32 %v736, %v804
    %v806 = vpop.f32.mrb[0].mxu0
    %807 = vmatprep.mubr.f32.mxu0 0.0
    %808 = vmatmul.mubr.f32.gmra.mrb[0].mxu0 %v634
    %v809 = vpop.f32.mrb[0].mxu0
    %v810 = vadd.f32 %v736, %v809
    %v811 = vpop.f32.mrb[0].mxu0
    %812 = vmatprep.mubr.f32.mxu0 0.0
    %813 = vmatmul.mubr.f32.gmra.mrb[0].mxu0 %v635
    %v814 = vpop.f32.mrb[0].mxu0
    %v815 = vadd.f32 %v736, %v814
    %v816 = vpop.f32.mrb[0].mxu0
    %817 = vmatprep.mubr.f32.mxu0 0.0
    %818 = vmatmul.mubr.f32.gmra.mrb[0].mxu0 %v636
    %v819 = vpop.f32.mrb[0].mxu0
    %v820 = vadd.f32 %v736, %v819
    %v821 = vpop.f32.mrb[0].mxu0
    %822 = vmatprep.mubr.f32.mxu0 0.0
    %823 = vmatmul.mubr.f32.gmra.mrb[0].mxu0 %v637
    %v824 = vpop.f32.mrb[0].mxu0
    %v825 = vadd.f32 %v736, %v824
    %v826 = vpop.f32.mrb[0].mxu0
    %827 = vmatprep.mubr.f32.mxu0 0.0
    %828 = vmatmul.mubr.f32.gmra.mrb[0].mxu0 %v638
    %v829 = vpop.f32.mrb[0].mxu0
    %v830 = vadd.f32 %v736, %v829
    %v831 = vpop.f32.mrb[0].mxu0
    %832 = vmatprep.mubr.f32.mxu0 0.0
    %833 = vmatmul.mubr.f32.gmra.mrb[0].mxu0 %v639
    %v834 = vpop.f32.mrb[0].mxu0
    %v835 = vadd.f32 %v736, %v834
    %v836 = vpop.f32.mrb[0].mxu0
    %837 = vmatprep.mubr.f32.mxu0 0.0
    %838 = vmatmul.mubr.f32.gmra.mrb[0].mxu0 %v640
    %v839 = vpop.f32.mrb[0].mxu0
    %v840 = vadd.f32 %v736, %v839
    %v841 = vpop.f32.mrb[0].mxu0
    %842 = vdwg.mxu0
    %v843 = vmax.f32 %v805, 0.0
    %v844 = vmax.f32 %v810, 0.0
    %v845 = vmax.f32 %v815, 0.0
    %v846 = vmax.f32 %v820, 0.0
    %v847 = vmax.f32 %v825, 0.0
    %v848 = vmax.f32 %v830, 0.0
    %v849 = vmax.f32 %v835, 0.0
    %v850 = vmax.f32 %v840, 0.0
    %v851 = vld [vmem:[#allocation13] sm:$0xff]
    %v852 = vld [vmem:[#allocation13 + $0x8] sm:$0xff]
    %v853 = vld [vmem:[#allocation13 + $0x10] sm:$0xff]
    %v854 = vld [vmem:[#allocation13 + $0x18] sm:$0xff]
    %v855 = vld [vmem:[#allocation13 + $0x20] sm:$0xff]
    %v856 = vld [vmem:[#allocation13 + $0x28] sm:$0xff]
    %v857 = vld [vmem:[#allocation13 + $0x30] sm:$0xff]
    %v858 = vld [vmem:[#allocation13 + $0x38] sm:$0xff]
    %v859 = vld [vmem:[#allocation13 + $0x40] sm:$0xff]
    %v860 = vld [vmem:[#allocation13 + $0x48] sm:$0xff]
    %v861 = vld [vmem:[#allocation13 + $0x50] sm:$0xff]
    %v862 = vld [vmem:[#allocation13 + $0x58] sm:$0xff]
    %v863 = vld [vmem:[#allocation13 + $0x60] sm:$0xff]
    %v864 = vld [vmem:[#allocation13 + $0x68] sm:$0xff]
    %v865 = vld [vmem:[#allocation13 + $0x70] sm:$0xff]
    %v866 = vld [vmem:[#allocation13 + $0x78] sm:$0xff]
    %v868 = vlaneseq
    %v869 = vshrl.u32 %v868, 7
    %v870 = vsub.s32 0, %v869
    %v871 = vrot.slane %v148, %v870
    %873 = vmatprep.subr.mxu0 0.0
    %874 = vmatpush1.msra.mxu0 %v851
    %875 = vmatprep.subr.mxu0 0.0
    %876 = vmatpush1.msra.mxu0 %v852
    %877 = vmatprep.subr.mxu0 0.0
    %878 = vmatpush1.msra.mxu0 %v853
    %879 = vmatprep.subr.mxu0 0.0
    %880 = vmatpush1.msra.mxu0 %v854
    %881 = vmatprep.subr.mxu0 0.0
    %882 = vmatpush1.msra.mxu0 %v855
    %883 = vmatprep.subr.mxu0 0.0
    %884 = vmatpush1.msra.mxu0 %v856
    %885 = vmatprep.subr.mxu0 0.0
    %886 = vmatpush1.msra.mxu0 %v857
    %887 = vmatprep.subr.mxu0 0.0
    %888 = vmatpush1.msra.mxu0 %v858
    %889 = vmatprep.subr.mxu0 0.0
    %890 = vmatpush1.msra.mxu0 %v859
    %891 = vmatprep.subr.mxu0 0.0
    %892 = vmatpush1.msra.mxu0 %v860
    %893 = vmatprep.subr.mxu0 0.0
    %894 = vmatpush1.msra.mxu0 %v861
    %895 = vmatprep.subr.mxu0 0.0
    %896 = vmatpush1.msra.mxu0 %v862
    %897 = vmatprep.subr.mxu0 0.0
    %898 = vmatpush1.msra.mxu0 %v863
    %899 = vmatprep.subr.mxu0 0.0
    %900 = vmatpush1.msra.mxu0 %v864
    %901 = vmatprep.subr.mxu0 0.0
    %902 = vmatpush1.msra.mxu0 %v865
    %903 = vmatprep.subr.mxu0 0.0
    %904 = vmatpush1.msra.mxu0 %v866
    %905 = vmatprep.subr.mxu0 0.0
    %906 = vmatpush1.msra.mxu0 0.0
    %907 = vmatprep.subr.mxu0 0.0
    %908 = vmatpush1.msra.mxu0 0.0
    %909 = vmatprep.subr.mxu0 0.0
    %910 = vmatpush1.msra.mxu0 0.0
    %911 = vmatprep.subr.mxu0 0.0
    %912 = vmatpush1.msra.mxu0 0.0
    %913 = vmatprep.subr.mxu0 0.0
    %914 = vmatpush1.msra.mxu0 0.0
    %915 = vmatprep.subr.mxu0 0.0
    %916 = vmatpush1.msra.mxu0 0.0
    %917 = vmatprep.subr.mxu0 0.0
    %918 = vmatpush1.msra.mxu0 0.0
    %919 = vmatprep.subr.mxu0 0.0
    %920 = vmatpush1.msra.mxu0 0.0
    %921 = vmatprep.subr.mxu0 0.0
    %922 = vmatpush1.msra.mxu0 0.0
    %923 = vmatprep.subr.mxu0 0.0
    %924 = vmatpush1.msra.mxu0 0.0
    %925 = vmatprep.subr.mxu0 0.0
    %926 = vmatpush1.msra.mxu0 0.0
    %927 = vmatprep.subr.mxu0 0.0
    %928 = vmatpush1.msra.mxu0 0.0
    %929 = vmatprep.subr.mxu0 0.0
    %930 = vmatpush1.msra.mxu0 0.0
    %931 = vmatprep.subr.mxu0 0.0
    %932 = vmatpush1.msra.mxu0 0.0
    %933 = vmatprep.subr.mxu0 0.0
    %934 = vmatpush1.msra.mxu0 0.0
    %935 = vmatprep.subr.mxu0 0.0
    %936 = vmatpush1.msra.mxu0 0.0
    %937 = vmatprep.mubr.f32.mxu0 0.0
    %938 = vmatmul.mubr.f32.gmra.mrb[0].mxu0 %v843
    %v939 = vpop.f32.mrb[0].mxu0
    %v940 = vadd.f32 %v871, %v939
    %v941 = vpop.f32.mrb[0].mxu0
    %942 = vmatprep.mubr.f32.mxu0 0.0
    %943 = vmatmul.mubr.f32.gmra.mrb[0].mxu0 %v844
    %v944 = vpop.f32.mrb[0].mxu0
    %v945 = vadd.f32 %v871, %v944
    %v946 = vpop.f32.mrb[0].mxu0
    %947 = vmatprep.mubr.f32.mxu0 0.0
    %948 = vmatmul.mubr.f32.gmra.mrb[0].mxu0 %v845
    %v949 = vpop.f32.mrb[0].mxu0
    %v950 = vadd.f32 %v871, %v949
    %v951 = vpop.f32.mrb[0].mxu0
    %952 = vmatprep.mubr.f32.mxu0 0.0
    %953 = vmatmul.mubr.f32.gmra.mrb[0].mxu0 %v846
    %v954 = vpop.f32.mrb[0].mxu0
    %v955 = vadd.f32 %v871, %v954
    %v956 = vpop.f32.mrb[0].mxu0
    %957 = vmatprep.mubr.f32.mxu0 0.0
    %958 = vmatmul.mubr.f32.gmra.mrb[0].mxu0 %v847
    %v959 = vpop.f32.mrb[0].mxu0
    %v960 = vadd.f32 %v871, %v959
    %v961 = vpop.f32.mrb[0].mxu0
    %962 = vmatprep.mubr.f32.mxu0 0.0
    %963 = vmatmul.mubr.f32.gmra.mrb[0].mxu0 %v848
    %v964 = vpop.f32.mrb[0].mxu0
    %v965 = vadd.f32 %v871, %v964
    %v966 = vpop.f32.mrb[0].mxu0
    %967 = vmatprep.mubr.f32.mxu0 0.0
    %968 = vmatmul.mubr.f32.gmra.mrb[0].mxu0 %v849
    %v969 = vpop.f32.mrb[0].mxu0
    %v970 = vadd.f32 %v871, %v969
    %v971 = vpop.f32.mrb[0].mxu0
    %972 = vmatprep.mubr.f32.mxu0 0.0
    %973 = vmatmul.mubr.f32.gmra.mrb[0].mxu0 %v850
    %v974 = vpop.f32.mrb[0].mxu0
    %v975 = vadd.f32 %v871, %v974
    %v976 = vpop.f32.mrb[0].mxu0
    %977 = vdwg.mxu0
    %v978 = vmax.f32 %v940, 0.0
    %v979 = vmax.f32 %v945, 0.0
    %v980 = vmax.f32 %v950, 0.0
    %v981 = vmax.f32 %v955, 0.0
    %v982 = vmax.f32 %v960, 0.0
    %v983 = vmax.f32 %v965, 0.0
    %v984 = vmax.f32 %v970, 0.0
    %v985 = vmax.f32 %v975, 0.0
    %v986 = vld [vmem:[#allocation14] sm:$0xff]
    %v987 = vld [vmem:[#allocation14 + $0x8] sm:$0xff]
    %v988 = vld [vmem:[#allocation14 + $0x10] sm:$0xff]
    %v989 = vld [vmem:[#allocation14 + $0x18] sm:$0xff]
    %v990 = vld [vmem:[#allocation14 + $0x20] sm:$0xff]
    %v991 = vld [vmem:[#allocation14 + $0x28] sm:$0xff]
    %v992 = vld [vmem:[#allocation14 + $0x30] sm:$0xff]
    %v993 = vld [vmem:[#allocation14 + $0x38] sm:$0xff]
    %v994 = vld [vmem:[#allocation14 + $0x40] sm:$0xff]
    %v995 = vld [vmem:[#allocation14 + $0x48] sm:$0xff]
    %v996 = vld [vmem:[#allocation14 + $0x50] sm:$0xff]
    %v997 = vld [vmem:[#allocation14 + $0x58] sm:$0xff]
    %v998 = vld [vmem:[#allocation14 + $0x60] sm:$0xff]
    %v999 = vld [vmem:[#allocation14 + $0x68] sm:$0xff]
    %v1000 = vld [vmem:[#allocation14 + $0x70] sm:$0xff]
    %v1001 = vld [vmem:[#allocation14 + $0x78] sm:$0xff]
    %v1003 = vlaneseq
    %v1004 = vshrl.u32 %v1003, 7
    %v1005 = vsub.s32 0, %v1004
    %v1006 = vrot.slane %v149, %v1005
    %1008 = vmatprep.subr.mxu0 0.0
    %1009 = vmatpush1.msra.mxu0 %v986
    %1010 = vmatprep.subr.mxu0 0.0
    %1011 = vmatpush1.msra.mxu0 %v987
    %1012 = vmatprep.subr.mxu0 0.0
    %1013 = vmatpush1.msra.mxu0 %v988
    %1014 = vmatprep.subr.mxu0 0.0
    %1015 = vmatpush1.msra.mxu0 %v989
    %1016 = vmatprep.subr.mxu0 0.0
    %1017 = vmatpush1.msra.mxu0 %v990
    %1018 = vmatprep.subr.mxu0 0.0
    %1019 = vmatpush1.msra.mxu0 %v991
    %1020 = vmatprep.subr.mxu0 0.0
    %1021 = vmatpush1.msra.mxu0 %v992
    %1022 = vmatprep.subr.mxu0 0.0
    %1023 = vmatpush1.msra.mxu0 %v993
    %1024 = vmatprep.subr.mxu0 0.0
    %1025 = vmatpush1.msra.mxu0 %v994
    %1026 = vmatprep.subr.mxu0 0.0
    %1027 = vmatpush1.msra.mxu0 %v995
    %1028 = vmatprep.subr.mxu0 0.0
    %1029 = vmatpush1.msra.mxu0 %v996
    %1030 = vmatprep.subr.mxu0 0.0
    %1031 = vmatpush1.msra.mxu0 %v997
    %1032 = vmatprep.subr.mxu0 0.0
    %1033 = vmatpush1.msra.mxu0 %v998
    %1034 = vmatprep.subr.mxu0 0.0
    %1035 = vmatpush1.msra.mxu0 %v999
    %1036 = vmatprep.subr.mxu0 0.0
    %1037 = vmatpush1.msra.mxu0 %v1000
    %1038 = vmatprep.subr.mxu0 0.0
    %1039 = vmatpush1.msra.mxu0 %v1001
    %1040 = vmatprep.subr.mxu0 0.0
    %1041 = vmatpush1.msra.mxu0 0.0
    %1042 = vmatprep.subr.mxu0 0.0
    %1043 = vmatpush1.msra.mxu0 0.0
    %1044 = vmatprep.subr.mxu0 0.0
    %1045 = vmatpush1.msra.mxu0 0.0
    %1046 = vmatprep.subr.mxu0 0.0
    %1047 = vmatpush1.msra.mxu0 0.0
    %1048 = vmatprep.subr.mxu0 0.0
    %1049 = vmatpush1.msra.mxu0 0.0
    %1050 = vmatprep.subr.mxu0 0.0
    %1051 = vmatpush1.msra.mxu0 0.0
    %1052 = vmatprep.subr.mxu0 0.0
    %1053 = vmatpush1.msra.mxu0 0.0
    %1054 = vmatprep.subr.mxu0 0.0
    %1055 = vmatpush1.msra.mxu0 0.0
    %1056 = vmatprep.subr.mxu0 0.0
    %1057 = vmatpush1.msra.mxu0 0.0
    %1058 = vmatprep.subr.mxu0 0.0
    %1059 = vmatpush1.msra.mxu0 0.0
    %1060 = vmatprep.subr.mxu0 0.0
    %1061 = vmatpush1.msra.mxu0 0.0
    %1062 = vmatprep.subr.mxu0 0.0
    %1063 = vmatpush1.msra.mxu0 0.0
    %1064 = vmatprep.subr.mxu0 0.0
    %1065 = vmatpush1.msra.mxu0 0.0
    %1066 = vmatprep.subr.mxu0 0.0
    %1067 = vmatpush1.msra.mxu0 0.0
    %1068 = vmatprep.subr.mxu0 0.0
    %1069 = vmatpush1.msra.mxu0 0.0
    %1070 = vmatprep.subr.mxu0 0.0
    %1071 = vmatpush1.msra.mxu0 0.0
    %1072 = vmatprep.mubr.f32.mxu0 0.0
    %1073 = vmatmul.mubr.f32.gmra.mrb[0].mxu0 %v978
    %v1074 = vpop.f32.mrb[0].mxu0
    %v1075 = vadd.f32 %v1006, %v1074
    %v1076 = vpop.f32.mrb[0].mxu0
    %1077 = vmatprep.mubr.f32.mxu0 0.0
    %1078 = vmatmul.mubr.f32.gmra.mrb[0].mxu0 %v979
    %v1079 = vpop.f32.mrb[0].mxu0
    %v1080 = vadd.f32 %v1006, %v1079
    %v1081 = vpop.f32.mrb[0].mxu0
    %1082 = vmatprep.mubr.f32.mxu0 0.0
    %1083 = vmatmul.mubr.f32.gmra.mrb[0].mxu0 %v980
    %v1084 = vpop.f32.mrb[0].mxu0
    %v1085 = vadd.f32 %v1006, %v1084
    %v1086 = vpop.f32.mrb[0].mxu0
    %1087 = vmatprep.mubr.f32.mxu0 0.0
    %1088 = vmatmul.mubr.f32.gmra.mrb[0].mxu0 %v981
    %v1089 = vpop.f32.mrb[0].mxu0
    %v1090 = vadd.f32 %v1006, %v1089
    %v1091 = vpop.f32.mrb[0].mxu0
    %1092 = vmatprep.mubr.f32.mxu0 0.0
    %1093 = vmatmul.mubr.f32.gmra.mrb[0].mxu0 %v982
    %v1094 = vpop.f32.mrb[0].mxu0
    %v1095 = vadd.f32 %v1006, %v1094
    %v1096 = vpop.f32.mrb[0].mxu0
    %1097 = vmatprep.mubr.f32.mxu0 0.0
    %1098 = vmatmul.mubr.f32.gmra.mrb[0].mxu0 %v983
    %v1099 = vpop.f32.mrb[0].mxu0
    %v1100 = vadd.f32 %v1006, %v1099
    %v1101 = vpop.f32.mrb[0].mxu0
    %1102 = vmatprep.mubr.f32.mxu0 0.0
    %1103 = vmatmul.mubr.f32.gmra.mrb[0].mxu0 %v984
    %v1104 = vpop.f32.mrb[0].mxu0
    %v1105 = vadd.f32 %v1006, %v1104
    %v1106 = vpop.f32.mrb[0].mxu0
    %1107 = vmatprep.mubr.f32.mxu0 0.0
    %1108 = vmatmul.mubr.f32.gmra.mrb[0].mxu0 %v985
    %v1109 = vpop.f32.mrb[0].mxu0
    %v1110 = vadd.f32 %v1006, %v1109
    %v1111 = vpop.f32.mrb[0].mxu0
    %1112 = vdwg.mxu0
    %1113 = vst [vmem:[#allocation16] sm:$0xff] %v1075
    %1114 = vst [vmem:[#allocation16 + $0x8] sm:$0xff] %v1080
    %1115 = vst [vmem:[#allocation16 + $0x10] sm:$0xff] %v1085
    %1116 = vst [vmem:[#allocation16 + $0x18] sm:$0xff] %v1090
    %1117 = vst [vmem:[#allocation16 + $0x20] sm:$0xff] %v1095
    %1118 = vst [vmem:[#allocation16 + $0x28] sm:$0xff] %v1100
    %1119 = vst [vmem:[#allocation16 + $0x30] sm:$0xff] %v1105
    %1120 = vst [vmem:[#allocation16 + $0x38] sm:$0xff] %v1110
    // Predicated region
    $region70: #{nodlink_decoder_forward.1} parent=1 // pred_check
      _
    $region71: #{nodlink_decoder_forward.1} parent=1 // pred_check_branch
      %1122 = sbr.rel (0) target = $region73
    $region72: #{nodlink_decoder_forward.1} parent=1 // pred_region
      %s1124 = ssub.s32 1024, 1024
      %1125 = vsyncadd [#allocation4], %s1124
      %s1126 = sshll.u32 [#allocation16], 4
      %s1127 = int_to_ptr.vmem [resolvable:$true] %s1126
      %1132 = dma.vmem_to_hbm [thread:$0]  %s1127, 1024, %s9, [#allocation4], 128, 128, 8
    $region73: #{nodlink_decoder_forward.1} parent=1 // pred_fallthru
      _
    // Predicated region
    $region74: #{nodlink_decoder_forward.1} parent=1 // pred_check
      _
    $region75: #{nodlink_decoder_forward.1} parent=1 // pred_check_branch
      %1134 = sbr.rel (0) target = $region77
    $region76: #{nodlink_decoder_forward.1} parent=1 // pred_region
      _
    $region77: #{nodlink_decoder_forward.1} parent=1 // pred_fallthru
      _
    // Predicated region
    $region78: #{nodlink_decoder_forward.1} parent=1 // pred_check
      _
    $region79: #{nodlink_decoder_forward.1} parent=1 // pred_check_branch
      %1136 = sbr.rel (0) target = $region81
    $region80: #{nodlink_decoder_forward.1} parent=1 // pred_region
      %1137 = dma.done [#allocation4], 1024
    $region81: #{nodlink_decoder_forward.1} parent=1 // pred_fallthru
      _
    // Predicated region
    $region82: #{nodlink_decoder_forward.1} parent=1 // pred_check
      _
    $region83: #{nodlink_decoder_forward.1} parent=1 // pred_check_branch
      %1139 = sbr.rel (0) target = $region85
    $region84: #{nodlink_decoder_forward.1} parent=1 // pred_region
      _
    $region85: #{nodlink_decoder_forward.1} parent=1 // pred_fallthru
      _
    %1140 = vsyncpa [#allocation3], 1
    %1141 = vsyncpa [#allocation6], 1
    %1142 = vsyncpa [#allocation9], 1
    %1143 = vsyncpa [#allocation12], 1
    %1144 = vsyncpa [#allocation15], 1
    %1145 = vsyncpa [#allocation4], 1

</llo_original>
